<compile_context>
chip_gen: v7x
topology: tpu7x:2x2x1
jax: 0.10.0
libtpu: 0.0.40
codegen_flags: <defaults>
</compile_context>

<pallas_src>
import numpy as np
import jax
import jax.numpy as jnp
from jax.experimental import pallas as pl
from jax.experimental.pallas import tpu as pltpu

H_IN = 15            # conv1 kernel height == input height
W_IN = 25            # input width (gives 16*21 = 336 flattened fc1 features)
W1 = W_IN - 1        # 24 conv1 output positions
W1P = W1 - 1         # 23 pool1 positions
W2 = W1P - 1         # 22 conv2 output positions
W2P = W2 - 1         # 21 pool2 positions
C1 = 8
C2 = 16
F_IN = W_IN * H_IN   # 375, input lane = h*25 + w (plain NCHW-reshape order)
S1 = W1 * C1         # 192, stage-1 lane = w*8 + c
S2 = W2 * C2         # 352, stage-2 lane = w*16 + c
OFF1 = 256           # 128-aligned column offset of the shifted conv1 copy
W1CAT = 512          # fused conv1 weight width (cols 192:256 and 448:512 are zero)
OFF2 = 384           # 128-aligned column offset of the shifted conv2 copy
W2CAT = 768          # fused conv2 weight width (cols 352:384 and 736:768 are zero)


def deepcat_kernel(x_ref, w1_ref, b1_ref, w2_ref, b2_ref,
                   wf1_ref, bf1_ref, wf2_ref, bf2_ref, wf3_ref, bf3_ref, o_ref):
    # bf16 feeds the MXU; accumulation and all elementwise math stay in f32.
    x = x_ref[...].astype(jnp.bfloat16)                                  # (nb, 375)

    # conv1 + bias + ReLU at positions w (cols 0:192) and w+1 (cols 256:448)
    # in a single fused matmul; elementwise max over the two 128-aligned
    # column groups reproduces MaxPool2d((1,2), stride=1).
    h1 = jnp.dot(x, w1_ref[...], preferred_element_type=jnp.float32) + b1_ref[...]
    h1 = jnp.maximum(h1, 0.0)                                            # (nb, 512)
    p1 = jnp.maximum(h1[:, 0:S1], h1[:, OFF1:OFF1 + S1])                 # (nb, 192)

    # conv2 + bias + ReLU + MaxPool2d((1,2), stride=1), same trick.
    h2 = jnp.dot(p1.astype(jnp.bfloat16), w2_ref[...],
                 preferred_element_type=jnp.float32) + b2_ref[...]
    h2 = jnp.maximum(h2, 0.0)                                            # (nb, 768)
    p2 = jnp.maximum(h2[:, 0:S2], h2[:, OFF2:OFF2 + S2])                 # (nb, 352)

    # FC stack.  drop1/drop2 are identity in eval mode.
    a1 = jnp.maximum(jnp.dot(p2.astype(jnp.bfloat16), wf1_ref[...],
                             preferred_element_type=jnp.float32) + bf1_ref[...], 0.0)
    a2 = jnp.maximum(jnp.dot(a1.astype(jnp.bfloat16), wf2_ref[...],
                             preferred_element_type=jnp.float32) + bf2_ref[...], 0.0)
    # Output last dim = 2 -> masked partial store; byte count is negligible here.
    o_ref[...] = jnp.dot(a2.astype(jnp.bfloat16), wf3_ref[...],
                         preferred_element_type=jnp.float32) + bf3_ref[...]


def pack_params(p):
    """Fold conv kernels + pool taps + the NCHW layout into bf16 matmul weights."""
    c1w = np.asarray(p["conv1_w"], np.float32)        # (8, 1, 15, 2)
    c1b = np.asarray(p["conv1_b"], np.float32)        # (8,)
    c2w = np.asarray(p["conv2_w"], np.float32)        # (16, 8, 1, 2)
    c2b = np.asarray(p["conv2_b"], np.float32)        # (16,)
    f1w = np.asarray(p["fc1_w"], np.float32)          # (64, 336)
    f1b = np.asarray(p["fc1_b"], np.float32)
    f2w = np.asarray(p["fc2_w"], np.float32)          # (10, 64)
    f2b = np.asarray(p["fc2_b"], np.float32)
    f3w = np.asarray(p["fc3_w"], np.float32)          # (2, 10)
    f3b = np.asarray(p["fc3_b"], np.float32)

    # Stage 1: rows indexed h*25 + w (plain NCHW reshape of the input, so the
    # wrapper needs no transpose).  Columns 0:192 = conv evaluated at position w,
    # columns OFF1:OFF1+192 = conv evaluated at position w+1 (the pool tap).
    k1a = c1w[:, 0, :, 0].T                           # (15, 8)  kw = 0
    k1b = c1w[:, 0, :, 1].T                           # (15, 8)  kw = 1
    rows = np.arange(H_IN) * W_IN                     # h*25
    w1 = np.zeros((F_IN, W1CAT), np.float32)
    for w in range(W1):                               # 24 conv1 positions
        w1[rows + w,     w * C1:(w + 1) * C1] = k1a
        w1[rows + w + 1, w * C1:(w + 1) * C1] = k1b
    for w in range(W1P):                              # 23 valid pool taps; slot 23 unused downstream
        w1[rows + w + 1, OFF1 + w * C1:OFF1 + (w + 1) * C1] = k1a
        w1[rows + w + 2, OFF1 + w * C1:OFF1 + (w + 1) * C1] = k1b
    b1 = np.zeros((1, W1CAT), np.float32)
    b1[0, :S1] = np.tile(c1b, W1)
    b1[0, OFF1:OFF1 + S1] = np.tile(c1b, W1)

    # Stage 2: same construction on the stage-1 lane layout (w*8 + c).
    k2a = c2w[:, :, 0, 0].T                           # (8, 16)
    k2b = c2w[:, :, 0, 1].T                           # (8, 16)
    w2 = np.zeros((S1, W2CAT), np.float32)
    for w in range(W2):                               # 22 conv2 positions
        w2[w * C1:(w + 1) * C1,       w * C2:(w + 1) * C2] = k2a
        w2[(w + 1) * C1:(w + 2) * C1, w * C2:(w + 1) * C2] = k2b
    for w in range(W2P):                              # 21 valid pool taps; slot 21 unused downstream
        w2[(w + 1) * C1:(w + 2) * C1, OFF2 + w * C2:OFF2 + (w + 1) * C2] = k2a
        w2[(w + 2) * C1:(w + 3) * C1, OFF2 + w * C2:OFF2 + (w + 1) * C2] = k2b
    b2 = np.zeros((1, W2CAT), np.float32)
    b2[0, :S2] = np.tile(c2b, W2)
    b2[0, OFF2:OFF2 + S2] = np.tile(c2b, W2)

    # fc1: torch flatten of (N, 16, 1, 21) is index c*21 + w; stage-2 lane order
    # is w*16 + c.  Rows for the invalid slot w == 21 stay zero.
    wf1 = np.zeros((S2, 64), np.float32)
    f1r = f1w.reshape(64, C2, W2P)                    # [k, c, w]
    for w in range(W2P):
        wf1[w * C2:(w + 1) * C2, :] = f1r[:, :, w].T  # (16, 64) -> [c, k]

    bf16 = jnp.bfloat16
    return (jnp.asarray(w1, bf16), jnp.asarray(b1),
            jnp.asarray(w2, bf16), jnp.asarray(b2),
            jnp.asarray(wf1, bf16), jnp.asarray(f1b[None, :], jnp.float32),
            jnp.asarray(f2w.T, bf16), jnp.asarray(f2b[None, :], jnp.float32),
            jnp.asarray(f3w.T, bf16), jnp.asarray(f3b[None, :], jnp.float32))


def deepcat_forward(x_nchw, p, *, block_n=1024, vmem_limit_bytes=None):
    """Batched DeepCAT forward via one gridded pallas_call.

    block_n=1024 is safe for every generation's default scoped VMEM (v5e 16 MiB);
    on v6e/v7x block_n=2048 is a good choice, 4096 on v7x with vmem_limit_bytes
    raised (mind the 64 MiB physical VMEM per TensorCore on v7x).
    """
    n, cin, h, w = x_nchw.shape
    assert cin == 1 and h == H_IN and w == W_IN, "DeepCAT expects (N, 1, 15, 25) inputs"

    weights = pack_params(p)

    # Layout permutation is folded into W1cat's rows, so this reshape is free
    # (no wrapper-side transpose / extra HBM pass over x); lane = h*25 + w.
    x_flat = x_nchw.reshape(n, F_IN).astype(jnp.float32)

    # Batch tile: multiple of 8 sublanes; capped at ~half the batch so the
    # "parallel" batch grid has >=2 steps whenever n allows, keeping both v7x
    # TensorCores busy (no-op for single-core v5e/v6e: one extra cheap step).
    half = ((n + 1) // 2 + 7) // 8 * 8
    nb = max(8, min(block_n, half))
    grid = (pl.cdiv(n, nb),)
    # No jnp.pad: a partial tail block reads garbage rows and its out-of-bounds
    # writes are dropped; rows are fully independent, so valid outputs are exact.

    in_specs = [pl.BlockSpec((nb, F_IN), lambda i: (i, 0))]        # streamed input block
    in_specs += [pl.BlockSpec(wgt.shape, lambda i: (0, 0),         # VMEM-resident weights,
                              pipeline_mode=pl.Buffered(1))        # single-buffered (constant)
                 for wgt in weights]

    return pl.pallas_call(
        deepcat_kernel,
        out_shape=jax.ShapeDtypeStruct((n, 2), jnp.float32),
        grid=grid,
        in_specs=in_specs,
        out_specs=pl.BlockSpec((nb, 2), lambda i: (i, 0)),
        compiler_params=pltpu.CompilerParams(
            dimension_semantics=("parallel",),    # megacore sharding on v7x
            vmem_limit_bytes=vmem_limit_bytes),
    )(x_flat, *weights)


def init_params(key):
    """Deterministic synthetic parameters with PyTorch default-ish scaling."""
    def uni(k, shape, fan_in):
        bound = 1.0 / np.sqrt(fan_in)
        return jax.random.uniform(k, shape, jnp.float32, -bound, bound)

    ks = jax.random.split(key, 10)
    return {
        "conv1_w": uni(ks[0], (8, 1, 15, 2), 15 * 2),
        "conv1_b": uni(ks[1], (8,), 15 * 2),
        "conv2_w": uni(ks[2], (16, 8, 1, 2), 8 * 2),
        "conv2_b": uni(ks[3], (16,), 8 * 2),
        "fc1_w": uni(ks[4], (64, 16 * 21), 16 * 21),
        "fc1_b": uni(ks[5], (64,), 16 * 21),
        "fc2_w": uni(ks[6], (10, 64), 64),
        "fc2_b": uni(ks[7], (10,), 64),
        "fc3_w": uni(ks[8], (2, 10), 10),
        "fc3_b": uni(ks[9], (2,), 10),
    }


def ref_forward(x_nchw, p):
    """Pure-JAX (XLA, f32) reference matching the PyTorch forward in eval mode."""
    y = jax.lax.conv_general_dilated(
        x_nchw, p["conv1_w"], (1, 1), "VALID",
        dimension_numbers=("NCHW", "OIHW", "NCHW"))
    y = jnp.maximum(y + p["conv1_b"][None, :, None, None], 0.0)
    y = jax.lax.reduce_window(y, -jnp.inf, jax.lax.max, (1, 1, 1, 2), (1, 1, 1, 1), "VALID")
    y = jax.lax.conv_general_dilated(
        y, p["conv2_w"], (1, 1), "VALID",
        dimension_numbers=("NCHW", "OIHW", "NCHW"))
    y = jnp.maximum(y + p["conv2_b"][None, :, None, None], 0.0)
    y = jax.lax.reduce_window(y, -jnp.inf, jax.lax.max, (1, 1, 1, 2), (1, 1, 1, 1), "VALID")
    flat = y.reshape(y.shape[0], -1)                 # (N, 16*21), torch .view order
    h = jnp.maximum(flat @ p["fc1_w"].T + p["fc1_b"], 0.0)
    h = jnp.maximum(h @ p["fc2_w"].T + p["fc2_b"], 0.0)
    return h @ p["fc3_w"].T + p["fc3_b"]


if __name__ == "__main__":
    key = jax.random.PRNGKey(0)
    k_x, k_p = jax.random.split(key)

    # Small NCHW input consistent with the module: (batch=16, 1, 15, 25).
    # The half-batch cap makes nb=8 here, exercising a 2-step "parallel" grid.
    x = jax.random.normal(k_x, (16, 1, 15, 25), jnp.float32)
    params = init_params(k_p)

    out = jax.block_until_ready(deepcat_forward(x, params))
    ref = jax.block_until_ready(ref_forward(x, params))

    # Tolerance loosened vs the f32 version: operands go through the bf16 MXU
    # path (accumulation stays f32 via preferred_element_type).
    np.testing.assert_allclose(np.asarray(out), np.asarray(ref), rtol=3e-2, atol=3e-2)

    print("KERNEL_OK")
</pallas_src>

<mosaic_0001>
module attributes {stable_mosaic.version = 11 : i64} {
  func.func @deepcat_kernel(%arg0: i32, %arg1: memref<8x375xf32, #tpu.memory_space<vmem>>, %arg2: memref<375x512xbf16, #tpu.memory_space<vmem>>, %arg3: memref<1x512xf32, #tpu.memory_space<vmem>>, %arg4: memref<192x768xbf16, #tpu.memory_space<vmem>>, %arg5: memref<1x768xf32, #tpu.memory_space<vmem>>, %arg6: memref<352x64xbf16, #tpu.memory_space<vmem>>, %arg7: memref<1x64xf32, #tpu.memory_space<vmem>>, %arg8: memref<64x10xbf16, #tpu.memory_space<vmem>>, %arg9: memref<1x10xf32, #tpu.memory_space<vmem>>, %arg10: memref<10x2xbf16, #tpu.memory_space<vmem>>, %arg11: memref<1x2xf32, #tpu.memory_space<vmem>>, %arg12: memref<8x2xf32, #tpu.memory_space<vmem>>) attributes {dimension_semantics = [#tpu.dimension_semantics<parallel>], iteration_bounds = array<i64: 2>, scalar_prefetch = 0 : i64, scratch_operands = 0 : i64, tpu.core_type = #tpu.core_type<tc>, window_params = [{transform_indices = @transform_0, window_bounds = array<i64: 8, 375>}, {pipeline_mode = #tpu.pipeline_mode<synchronous>, transform_indices = @transform_1, window_bounds = array<i64: 375, 512>}, {pipeline_mode = #tpu.pipeline_mode<synchronous>, transform_indices = @transform_2, window_bounds = array<i64: 1, 512>}, {pipeline_mode = #tpu.pipeline_mode<synchronous>, transform_indices = @transform_3, window_bounds = array<i64: 192, 768>}, {pipeline_mode = #tpu.pipeline_mode<synchronous>, transform_indices = @transform_4, window_bounds = array<i64: 1, 768>}, {pipeline_mode = #tpu.pipeline_mode<synchronous>, transform_indices = @transform_5, window_bounds = array<i64: 352, 64>}, {pipeline_mode = #tpu.pipeline_mode<synchronous>, transform_indices = @transform_6, window_bounds = array<i64: 1, 64>}, {pipeline_mode = #tpu.pipeline_mode<synchronous>, transform_indices = @transform_7, window_bounds = array<i64: 64, 10>}, {pipeline_mode = #tpu.pipeline_mode<synchronous>, transform_indices = @transform_8, window_bounds = array<i64: 1, 10>}, {pipeline_mode = #tpu.pipeline_mode<synchronous>, transform_indices = @transform_9, window_bounds = array<i64: 10, 2>}, {pipeline_mode = #tpu.pipeline_mode<synchronous>, transform_indices = @transform_10, window_bounds = array<i64: 1, 2>}, {transform_indices = @transform_11, window_bounds = array<i64: 8, 2>}]} {
    %c0 = arith.constant 0 : index
    %c0_0 = arith.constant 0 : index
    %0 = vector.load %arg1[%c0, %c0_0] : memref<8x375xf32, #tpu.memory_space<vmem>>, vector<8x375xf32>
    %1 = arith.truncf %0 : vector<8x375xf32> to vector<8x375xbf16>
    %c0_1 = arith.constant 0 : index
    %c0_2 = arith.constant 0 : index
    %2 = vector.load %arg2[%c0_1, %c0_2] : memref<375x512xbf16, #tpu.memory_space<vmem>>, vector<375x512xbf16>
    %cst = arith.constant dense<0.000000e+00> : vector<8x512xf32>
    %3 = tpu.matmul %1, %2, %cst {dimension_numbers = #tpu.dot_dimension_numbers<[1], [0], [0], [1], [0, 0, 1, 1], [], []>} : vector<8x375xbf16>, vector<375x512xbf16>, vector<8x512xf32> -> vector<8x512xf32>
    %c0_3 = arith.constant 0 : index
    %c0_4 = arith.constant 0 : index
    %4 = vector.load %arg3[%c0_3, %c0_4] : memref<1x512xf32, #tpu.memory_space<vmem>>, vector<1x512xf32>
    %5 = vector.broadcast %4 : vector<1x512xf32> to vector<8x512xf32>
    %6 = arith.addf %3, %5 : vector<8x512xf32>
    %cst_5 = arith.constant 0.000000e+00 : f32
    %7 = vector.broadcast %cst_5 : f32 to vector<8x512xf32>
    %8 = arith.maximumf %6, %7 : vector<8x512xf32>
    %9 = vector.extract_strided_slice %8 {offsets = [0, 0], sizes = [8, 192], strides = [1, 1]} : vector<8x512xf32> to vector<8x192xf32>
    %10 = vector.extract_strided_slice %8 {offsets = [0, 256], sizes = [8, 192], strides = [1, 1]} : vector<8x512xf32> to vector<8x192xf32>
    %11 = arith.maximumf %9, %10 : vector<8x192xf32>
    %12 = arith.truncf %11 : vector<8x192xf32> to vector<8x192xbf16>
    %c0_6 = arith.constant 0 : index
    %c0_7 = arith.constant 0 : index
    %13 = vector.load %arg4[%c0_6, %c0_7] : memref<192x768xbf16, #tpu.memory_space<vmem>>, vector<192x768xbf16>
    %cst_8 = arith.constant dense<0.000000e+00> : vector<8x768xf32>
    %14 = tpu.matmul %12, %13, %cst_8 {dimension_numbers = #tpu.dot_dimension_numbers<[1], [0], [0], [1], [0, 0, 1, 1], [], []>} : vector<8x192xbf16>, vector<192x768xbf16>, vector<8x768xf32> -> vector<8x768xf32>
    %c0_9 = arith.constant 0 : index
    %c0_10 = arith.constant 0 : index
    %15 = vector.load %arg5[%c0_9, %c0_10] : memref<1x768xf32, #tpu.memory_space<vmem>>, vector<1x768xf32>
    %16 = vector.broadcast %15 : vector<1x768xf32> to vector<8x768xf32>
    %17 = arith.addf %14, %16 : vector<8x768xf32>
    %cst_11 = arith.constant 0.000000e+00 : f32
    %18 = vector.broadcast %cst_11 : f32 to vector<8x768xf32>
    %19 = arith.maximumf %17, %18 : vector<8x768xf32>
    %20 = vector.extract_strided_slice %19 {offsets = [0, 0], sizes = [8, 352], strides = [1, 1]} : vector<8x768xf32> to vector<8x352xf32>
    %21 = vector.extract_strided_slice %19 {offsets = [0, 384], sizes = [8, 352], strides = [1, 1]} : vector<8x768xf32> to vector<8x352xf32>
    %22 = arith.maximumf %20, %21 : vector<8x352xf32>
    %23 = arith.truncf %22 : vector<8x352xf32> to vector<8x352xbf16>
    %c0_12 = arith.constant 0 : index
    %c0_13 = arith.constant 0 : index
    %24 = vector.load %arg6[%c0_12, %c0_13] : memref<352x64xbf16, #tpu.memory_space<vmem>>, vector<352x64xbf16>
    %cst_14 = arith.constant dense<0.000000e+00> : vector<8x64xf32>
    %25 = tpu.matmul %23, %24, %cst_14 {dimension_numbers = #tpu.dot_dimension_numbers<[1], [0], [0], [1], [0, 0, 1, 1], [], []>} : vector<8x352xbf16>, vector<352x64xbf16>, vector<8x64xf32> -> vector<8x64xf32>
    %c0_15 = arith.constant 0 : index
    %c0_16 = arith.constant 0 : index
    %26 = vector.load %arg7[%c0_15, %c0_16] : memref<1x64xf32, #tpu.memory_space<vmem>>, vector<1x64xf32>
    %27 = vector.broadcast %26 : vector<1x64xf32> to vector<8x64xf32>
    %28 = arith.addf %25, %27 : vector<8x64xf32>
    %cst_17 = arith.constant 0.000000e+00 : f32
    %29 = vector.broadcast %cst_17 : f32 to vector<8x64xf32>
    %30 = arith.maximumf %28, %29 : vector<8x64xf32>
    %31 = arith.truncf %30 : vector<8x64xf32> to vector<8x64xbf16>
    %c0_18 = arith.constant 0 : index
    %c0_19 = arith.constant 0 : index
    %32 = vector.load %arg8[%c0_18, %c0_19] : memref<64x10xbf16, #tpu.memory_space<vmem>>, vector<64x10xbf16>
    %cst_20 = arith.constant dense<0.000000e+00> : vector<8x10xf32>
    %33 = tpu.matmul %31, %32, %cst_20 {dimension_numbers = #tpu.dot_dimension_numbers<[1], [0], [0], [1], [0, 0, 1, 1], [], []>} : vector<8x64xbf16>, vector<64x10xbf16>, vector<8x10xf32> -> vector<8x10xf32>
    %c0_21 = arith.constant 0 : index
    %c0_22 = arith.constant 0 : index
    %34 = vector.load %arg9[%c0_21, %c0_22] : memref<1x10xf32, #tpu.memory_space<vmem>>, vector<1x10xf32>
    %35 = vector.broadcast %34 : vector<1x10xf32> to vector<8x10xf32>
    %36 = arith.addf %33, %35 : vector<8x10xf32>
    %cst_23 = arith.constant 0.000000e+00 : f32
    %37 = vector.broadcast %cst_23 : f32 to vector<8x10xf32>
    %38 = arith.maximumf %36, %37 : vector<8x10xf32>
    %39 = arith.truncf %38 : vector<8x10xf32> to vector<8x10xbf16>
    %c0_24 = arith.constant 0 : index
    %c0_25 = arith.constant 0 : index
    %40 = vector.load %arg10[%c0_24, %c0_25] : memref<10x2xbf16, #tpu.memory_space<vmem>>, vector<10x2xbf16>
    %cst_26 = arith.constant dense<0.000000e+00> : vector<8x2xf32>
    %41 = tpu.matmul %39, %40, %cst_26 {dimension_numbers = #tpu.dot_dimension_numbers<[1], [0], [0], [1], [0, 0, 1, 1], [], []>} : vector<8x10xbf16>, vector<10x2xbf16>, vector<8x2xf32> -> vector<8x2xf32>
    %c0_27 = arith.constant 0 : index
    %c0_28 = arith.constant 0 : index
    %42 = vector.load %arg11[%c0_27, %c0_28] : memref<1x2xf32, #tpu.memory_space<vmem>>, vector<1x2xf32>
    %43 = vector.broadcast %42 : vector<1x2xf32> to vector<8x2xf32>
    %44 = arith.addf %41, %43 : vector<8x2xf32>
    %c0_29 = arith.constant 0 : index
    %c0_30 = arith.constant 0 : index
    %45 = vector.load %arg12[%c0_29, %c0_30] : memref<8x2xf32, #tpu.memory_space<vmem>>, vector<8x2xf32>
    tpu.vector_store %arg12[%c0_29, %c0_30], %44 {strides = array<i32>} : memref<8x2xf32, #tpu.memory_space<vmem>>, vector<8x2xf32>,
    return
  }
  func.func @transform_0(%arg0: i32) -> (i32, i32) {
    %c0_i32 = arith.constant 0 : i32
    %c0_i32_0 = arith.constant 0 : i32
    return %arg0, %c0_i32 : i32, i32
  }
  func.func @transform_1(%arg0: i32) -> (i32, i32) {
    %c0_i32 = arith.constant 0 : i32
    %c0_i32_0 = arith.constant 0 : i32
    %c0_i32_1 = arith.constant 0 : i32
    return %c0_i32, %c0_i32_0 : i32, i32
  }
  func.func @transform_2(%arg0: i32) -> (i32, i32) {
    %c0_i32 = arith.constant 0 : i32
    %c0_i32_0 = arith.constant 0 : i32
    %c0_i32_1 = arith.constant 0 : i32
    return %c0_i32, %c0_i32_0 : i32, i32
  }
  func.func @transform_3(%arg0: i32) -> (i32, i32) {
    %c0_i32 = arith.constant 0 : i32
    %c0_i32_0 = arith.constant 0 : i32
    %c0_i32_1 = arith.constant 0 : i32
    return %c0_i32, %c0_i32_0 : i32, i32
  }
  func.func @transform_4(%arg0: i32) -> (i32, i32) {
    %c0_i32 = arith.constant 0 : i32
    %c0_i32_0 = arith.constant 0 : i32
    %c0_i32_1 = arith.constant 0 : i32
    return %c0_i32, %c0_i32_0 : i32, i32
  }
  func.func @transform_5(%arg0: i32) -> (i32, i32) {
    %c0_i32 = arith.constant 0 : i32
    %c0_i32_0 = arith.constant 0 : i32
    %c0_i32_1 = arith.constant 0 : i32
    return %c0_i32, %c0_i32_0 : i32, i32
  }
  func.func @transform_6(%arg0: i32) -> (i32, i32) {
    %c0_i32 = arith.constant 0 : i32
    %c0_i32_0 = arith.constant 0 : i32
    %c0_i32_1 = arith.constant 0 : i32
    return %c0_i32, %c0_i32_0 : i32, i32
  }
  func.func @transform_7(%arg0: i32) -> (i32, i32) {
    %c0_i32 = arith.constant 0 : i32
    %c0_i32_0 = arith.constant 0 : i32
    %c0_i32_1 = arith.constant 0 : i32
    return %c0_i32, %c0_i32_0 : i32, i32
  }
  func.func @transform_8(%arg0: i32) -> (i32, i32) {
    %c0_i32 = arith.constant 0 : i32
    %c0_i32_0 = arith.constant 0 : i32
    %c0_i32_1 = arith.constant 0 : i32
    return %c0_i32, %c0_i32_0 : i32, i32
  }
  func.func @transform_9(%arg0: i32) -> (i32, i32) {
    %c0_i32 = arith.constant 0 : i32
    %c0_i32_0 = arith.constant 0 : i32
    %c0_i32_1 = arith.constant 0 : i32
    return %c0_i32, %c0_i32_0 : i32, i32
  }
  func.func @transform_10(%arg0: i32) -> (i32, i32) {
    %c0_i32 = arith.constant 0 : i32
    %c0_i32_0 = arith.constant 0 : i32
    %c0_i32_1 = arith.constant 0 : i32
    return %c0_i32, %c0_i32_0 : i32, i32
  }
  func.func @transform_11(%arg0: i32) -> (i32, i32) {
    %c0_i32 = arith.constant 0 : i32
    %c0_i32_0 = arith.constant 0 : i32
    return %arg0, %c0_i32 : i32, i32
  }
}

</mosaic_0001>

<llo_original>
// kernel: tpu_custom_call.1
$region0: #{tpu_custom_call.1}
  #allocation0 [shape = 'u32[]', space=smem, size = 0x4, offset = 0x4, fixed_abs, tag = 'smem constant byte address 0x4 - core index']
  #allocation1 [shape = 'u32[144,128]{1,0:T(1,128)}', space=vmem, size = 0x12000, scoped, tag = 'internal scratch']
  %s0 = inlined_call_operand.vmem [shape: f32[16,375], index: 0, kind: input, shape index: {}]
  %s1 = inlined_call_operand.hbm [shape: bf16[375,512], index: 1, kind: input, shape index: {}]
  %s2 = inlined_call_operand.vmem [shape: f32[1,512], index: 2, kind: input, shape index: {}]
  %s3 = inlined_call_operand.hbm [shape: bf16[192,768], index: 3, kind: input, shape index: {}]
  %s4 = inlined_call_operand.vmem [shape: f32[1,768], index: 4, kind: input, shape index: {}]
  %s5 = inlined_call_operand.vmem [shape: bf16[352,64], index: 5, kind: input, shape index: {}]
  %s6 = inlined_call_operand.vmem [shape: f32[1,64], index: 6, kind: input, shape index: {}]
  %s7 = inlined_call_operand.vmem [shape: bf16[64,10], index: 7, kind: input, shape index: {}]
  %s8 = inlined_call_operand.vmem [shape: f32[1,10], index: 8, kind: input, shape index: {}]
  %s9 = inlined_call_operand.vmem [shape: bf16[10,2], index: 9, kind: input, shape index: {}]
  %s10 = inlined_call_operand.vmem [shape: f32[1,2], index: 10, kind: input, shape index: {}]
  %s11 = inlined_call_operand.vmem [shape: f32[16,2], index: 11, kind: output, shape index: {}]
  %s12 = sld [smem:[#allocation0]]
  $region85: #{tpu_custom_call.1} parent=0
    _
  %s14 = ssub.s32 1, %s12
  %s15 = scalar_select 0, %s14, %s12
  $region1: #{tpu_custom_call.1} parent=0
    #allocation2 [shape = 'u8[385024]{0}', space=vmem, size = 0x5e000, scoped, tag = 'input window, operand 1, single buffered']
    #allocation3 [shape = 's32[2]{0}', space=sflag, size = 0x8, scoped, tag = 'scoped memory for tpu_custom_call.1']
    #allocation4 [shape = 'u8[294912]{0}', space=vmem, size = 0x48000, scoped, tag = 'input window, operand 3, single buffered']
    #allocation5 [shape = 's32[1]{0}', space=sflag, size = 0x4, scoped, tag = 'scoped memory for tpu_custom_call.1']
    %16 = vsyncpa [#allocation3], 0
    %17 = vsyncpa [#allocation5], 0
    loop: start=0, step=1, limit=4
    $region2: #{tpu_custom_call.1} parent=1 // loop_pre_header
      _
    $region3: #{tpu_custom_call.1} parent=1 // loop_header
      %s19 = sphi 0, %s23
      %p20 = scmp.ge.s32.totalorder %s19, 4
      %s29 = sphi 0, %s31
      %s32 = sphi 0, %s29
      %s33 = sphi 0, %s32
      %s49 = sphi 0, %s33
      %s53 = sphi 0, %s53
      %s55 = sphi 0, %s53
      %s56 = sphi 0, %s55
      %s70 = sphi 0, %s56
      %s74 = sphi 0, %s74
      %s76 = sphi 0, %s74
      %s77 = sphi 0, %s76
      %s91 = sphi 0, %s77
      %s95 = sphi 0, %s95
      %s97 = sphi 0, %s95
      %s98 = sphi 0, %s97
      %s112 = sphi 0, %s98
      %s116 = sphi 0, %s116
      %s118 = sphi 0, %s116
      %s119 = sphi 0, %s118
      %s133 = sphi 0, %s119
      %s137 = sphi 0, %s137
      %s139 = sphi 0, %s137
      %s140 = sphi 0, %s139
      %s154 = sphi 0, %s140
      %s158 = sphi 0, %s158
      %s160 = sphi 0, %s158
      %s161 = sphi 0, %s160
      %s175 = sphi 0, %s161
      %s179 = sphi 0, %s179
      %s181 = sphi 0, %s179
      %s182 = sphi 0, %s181
      %s196 = sphi 0, %s182
      %s200 = sphi 0, %s200
      %s202 = sphi 0, %s200
      %s203 = sphi 0, %s202
      %s217 = sphi 0, %s203
      %s221 = sphi 0, %s221
      %s223 = sphi 0, %s221
      %s224 = sphi 0, %s223
      %s238 = sphi 0, %s224
      %s242 = sphi 0, %s242
      %s244 = sphi 0, %s242
      %s245 = sphi 0, %s244
      %s259 = sphi 0, %s245
      %s265 = sphi 0, %s267
      %s268 = sphi 0, %s265
      %s269 = sphi 0, %s268
      %s285 = sphi 0, %s269
    $region4: #{tpu_custom_call.1} parent=1 // loop_header_branch
      %22 = sbr.rel (%p20) target = $region8
    $region5: #{tpu_custom_call.1} parent=1 // loop_body
      %s24 = ssub.s32 %s19, 1
      %s25 = ssub.s32 %s19, 2
      %s26 = sadd.s32 %s19, 1
      %s27 = ssub.s32 %s19, %s26
      %p28 = scmp.eq.s32.totalorder %s27, 0
      %s30 = sadd.s32 %s29, 1
      %s31 = scalar_select %p28, %s29, %s30
      %p34 = pneg %p28
      %p35 = scmp.eq.s32.totalorder %s19, 1
      %p36 = por %p34, %p35
      %p37 = scmp.ne.s32.totalorder %s29, %s32
      %p38 = scmp.eq.s32.totalorder %s19, 0
      %p39 = por %p37, %p38
      %p40 = scmp.ne.s32.totalorder %s29, %s32
      %p41 = scmp.eq.s32.totalorder %s24, 1
      %p42 = por %p40, %p41
      %p43 = scmp.ne.s32.totalorder %s32, %s33
      %p44 = scmp.eq.s32.totalorder %s24, 0
      %p45 = por %p43, %p44
      %p46 = scmp.ne.s32.totalorder %s32, %s33
      %p47 = scmp.eq.s32.totalorder %s25, 1
      %p48 = por %p46, %p47
      %p50 = scmp.ne.s32.totalorder %s33, %s49
      %p51 = scmp.eq.s32.totalorder %s25, 0
      %p52 = por %p50, %p51
      %s54 = sadd.s32 %s53, 1
      %p57 = scmp.eq.s32.totalorder %s19, 1
      %p58 = scmp.ne.s32.totalorder %s53, %s55
      %p59 = scmp.eq.s32.totalorder %s19, 0
      %p60 = por %p58, %p59
      %p61 = scmp.ne.s32.totalorder %s53, %s55
      %p62 = scmp.eq.s32.totalorder %s24, 1
      %p63 = por %p61, %p62
      %p64 = scmp.ne.s32.totalorder %s55, %s56
      %p65 = scmp.eq.s32.totalorder %s24, 0
      %p66 = por %p64, %p65
      %p67 = scmp.ne.s32.totalorder %s55, %s56
      %p68 = scmp.eq.s32.totalorder %s25, 1
      %p69 = por %p67, %p68
      %p71 = scmp.ne.s32.totalorder %s56, %s70
      %p72 = scmp.eq.s32.totalorder %s25, 0
      %p73 = por %p71, %p72
      %s75 = sadd.s32 %s74, 1
      %p78 = scmp.eq.s32.totalorder %s19, 1
      %p79 = scmp.ne.s32.totalorder %s74, %s76
      %p80 = scmp.eq.s32.totalorder %s19, 0
      %p81 = por %p79, %p80
      %p82 = scmp.ne.s32.totalorder %s74, %s76
      %p83 = scmp.eq.s32.totalorder %s24, 1
      %p84 = por %p82, %p83
      %p85 = scmp.ne.s32.totalorder %s76, %s77
      %p86 = scmp.eq.s32.totalorder %s24, 0
      %p87 = por %p85, %p86
      %p88 = scmp.ne.s32.totalorder %s76, %s77
      %p89 = scmp.eq.s32.totalorder %s25, 1
      %p90 = por %p88, %p89
      %p92 = scmp.ne.s32.totalorder %s77, %s91
      %p93 = scmp.eq.s32.totalorder %s25, 0
      %p94 = por %p92, %p93
      %s96 = sadd.s32 %s95, 1
      %p99 = scmp.eq.s32.totalorder %s19, 1
      %p100 = scmp.ne.s32.totalorder %s95, %s97
      %p101 = scmp.eq.s32.totalorder %s19, 0
      %p102 = por %p100, %p101
      %p103 = scmp.ne.s32.totalorder %s95, %s97
      %p104 = scmp.eq.s32.totalorder %s24, 1
      %p105 = por %p103, %p104
      %p106 = scmp.ne.s32.totalorder %s97, %s98
      %p107 = scmp.eq.s32.totalorder %s24, 0
      %p108 = por %p106, %p107
      %p109 = scmp.ne.s32.totalorder %s97, %s98
      %p110 = scmp.eq.s32.totalorder %s25, 1
      %p111 = por %p109, %p110
      %p113 = scmp.ne.s32.totalorder %s98, %s112
      %p114 = scmp.eq.s32.totalorder %s25, 0
      %p115 = por %p113, %p114
      %s117 = sadd.s32 %s116, 1
      %p120 = scmp.eq.s32.totalorder %s19, 1
      %p121 = scmp.ne.s32.totalorder %s116, %s118
      %p122 = scmp.eq.s32.totalorder %s19, 0
      %p123 = por %p121, %p122
      %p124 = scmp.ne.s32.totalorder %s116, %s118
      %p125 = scmp.eq.s32.totalorder %s24, 1
      %p126 = por %p124, %p125
      %p127 = scmp.ne.s32.totalorder %s118, %s119
      %p128 = scmp.eq.s32.totalorder %s24, 0
      %p129 = por %p127, %p128
      %p130 = scmp.ne.s32.totalorder %s118, %s119
      %p131 = scmp.eq.s32.totalorder %s25, 1
      %p132 = por %p130, %p131
      %p134 = scmp.ne.s32.totalorder %s119, %s133
      %p135 = scmp.eq.s32.totalorder %s25, 0
      %p136 = por %p134, %p135
      %s138 = sadd.s32 %s137, 1
      %p141 = scmp.eq.s32.totalorder %s19, 1
      %p142 = scmp.ne.s32.totalorder %s137, %s139
      %p143 = scmp.eq.s32.totalorder %s19, 0
      %p144 = por %p142, %p143
      %p145 = scmp.ne.s32.totalorder %s137, %s139
      %p146 = scmp.eq.s32.totalorder %s24, 1
      %p147 = por %p145, %p146
      %p148 = scmp.ne.s32.totalorder %s139, %s140
      %p149 = scmp.eq.s32.totalorder %s24, 0
      %p150 = por %p148, %p149
      %p151 = scmp.ne.s32.totalorder %s139, %s140
      %p152 = scmp.eq.s32.totalorder %s25, 1
      %p153 = por %p151, %p152
      %p155 = scmp.ne.s32.totalorder %s140, %s154
      %p156 = scmp.eq.s32.totalorder %s25, 0
      %p157 = por %p155, %p156
      %s159 = sadd.s32 %s158, 1
      %p162 = scmp.eq.s32.totalorder %s19, 1
      %p163 = scmp.ne.s32.totalorder %s158, %s160
      %p164 = scmp.eq.s32.totalorder %s19, 0
      %p165 = por %p163, %p164
      %p166 = scmp.ne.s32.totalorder %s158, %s160
      %p167 = scmp.eq.s32.totalorder %s24, 1
      %p168 = por %p166, %p167
      %p169 = scmp.ne.s32.totalorder %s160, %s161
      %p170 = scmp.eq.s32.totalorder %s24, 0
      %p171 = por %p169, %p170
      %p172 = scmp.ne.s32.totalorder %s160, %s161
      %p173 = scmp.eq.s32.totalorder %s25, 1
      %p174 = por %p172, %p173
      %p176 = scmp.ne.s32.totalorder %s161, %s175
      %p177 = scmp.eq.s32.totalorder %s25, 0
      %p178 = por %p176, %p177
      %s180 = sadd.s32 %s179, 1
      %p183 = scmp.eq.s32.totalorder %s19, 1
      %p184 = scmp.ne.s32.totalorder %s179, %s181
      %p185 = scmp.eq.s32.totalorder %s19, 0
      %p186 = por %p184, %p185
      %p187 = scmp.ne.s32.totalorder %s179, %s181
      %p188 = scmp.eq.s32.totalorder %s24, 1
      %p189 = por %p187, %p188
      %p190 = scmp.ne.s32.totalorder %s181, %s182
      %p191 = scmp.eq.s32.totalorder %s24, 0
      %p192 = por %p190, %p191
      %p193 = scmp.ne.s32.totalorder %s181, %s182
      %p194 = scmp.eq.s32.totalorder %s25, 1
      %p195 = por %p193, %p194
      %p197 = scmp.ne.s32.totalorder %s182, %s196
      %p198 = scmp.eq.s32.totalorder %s25, 0
      %p199 = por %p197, %p198
      %s201 = sadd.s32 %s200, 1
      %p204 = scmp.eq.s32.totalorder %s19, 1
      %p205 = scmp.ne.s32.totalorder %s200, %s202
      %p206 = scmp.eq.s32.totalorder %s19, 0
      %p207 = por %p205, %p206
      %p208 = scmp.ne.s32.totalorder %s200, %s202
      %p209 = scmp.eq.s32.totalorder %s24, 1
      %p210 = por %p208, %p209
      %p211 = scmp.ne.s32.totalorder %s202, %s203
      %p212 = scmp.eq.s32.totalorder %s24, 0
      %p213 = por %p211, %p212
      %p214 = scmp.ne.s32.totalorder %s202, %s203
      %p215 = scmp.eq.s32.totalorder %s25, 1
      %p216 = por %p214, %p215
      %p218 = scmp.ne.s32.totalorder %s203, %s217
      %p219 = scmp.eq.s32.totalorder %s25, 0
      %p220 = por %p218, %p219
      %s222 = sadd.s32 %s221, 1
      %p225 = scmp.eq.s32.totalorder %s19, 1
      %p226 = scmp.ne.s32.totalorder %s221, %s223
      %p227 = scmp.eq.s32.totalorder %s19, 0
      %p228 = por %p226, %p227
      %p229 = scmp.ne.s32.totalorder %s221, %s223
      %p230 = scmp.eq.s32.totalorder %s24, 1
      %p231 = por %p229, %p230
      %p232 = scmp.ne.s32.totalorder %s223, %s224
      %p233 = scmp.eq.s32.totalorder %s24, 0
      %p234 = por %p232, %p233
      %p235 = scmp.ne.s32.totalorder %s223, %s224
      %p236 = scmp.eq.s32.totalorder %s25, 1
      %p237 = por %p235, %p236
      %p239 = scmp.ne.s32.totalorder %s224, %s238
      %p240 = scmp.eq.s32.totalorder %s25, 0
      %p241 = por %p239, %p240
      %s243 = sadd.s32 %s242, 1
      %p246 = scmp.eq.s32.totalorder %s19, 1
      %p247 = scmp.ne.s32.totalorder %s242, %s244
      %p248 = scmp.eq.s32.totalorder %s19, 0
      %p249 = por %p247, %p248
      %p250 = scmp.ne.s32.totalorder %s242, %s244
      %p251 = scmp.eq.s32.totalorder %s24, 1
      %p252 = por %p250, %p251
      %p253 = scmp.ne.s32.totalorder %s244, %s245
      %p254 = scmp.eq.s32.totalorder %s24, 0
      %p255 = por %p253, %p254
      %p256 = scmp.ne.s32.totalorder %s244, %s245
      %p257 = scmp.eq.s32.totalorder %s25, 1
      %p258 = por %p256, %p257
      %p260 = scmp.ne.s32.totalorder %s245, %s259
      %p261 = scmp.eq.s32.totalorder %s25, 0
      %p262 = por %p260, %p261
      %s263 = ssub.s32 %s19, %s26
      %p264 = scmp.eq.s32.totalorder %s263, 0
      %s266 = sadd.s32 %s265, 1
      %s267 = scalar_select %p264, %s265, %s266
      %p270 = pneg %p264
      %p271 = scmp.eq.s32.totalorder %s19, 1
      %p272 = por %p270, %p271
      %p273 = scmp.ne.s32.totalorder %s265, %s268
      %p274 = scmp.eq.s32.totalorder %s19, 0
      %p275 = por %p273, %p274
      %p276 = scmp.ne.s32.totalorder %s265, %s268
      %p277 = scmp.eq.s32.totalorder %s24, 1
      %p278 = por %p276, %p277
      %p279 = scmp.ne.s32.totalorder %s268, %s269
      %p280 = scmp.eq.s32.totalorder %s24, 0
      %p281 = por %p279, %p280
      %p282 = scmp.ne.s32.totalorder %s268, %s269
      %p283 = scmp.eq.s32.totalorder %s25, 1
      %p284 = por %p282, %p283
      %p286 = scmp.ne.s32.totalorder %s269, %s285
      %p287 = scmp.eq.s32.totalorder %s25, 0
      %p288 = por %p286, %p287
      %p289 = scmp.le.s32.totalorder 1, %s19
      %p290 = scmp.lt.s32.totalorder %s19, 3
      %p291 = pnand %p289, %p290
      %p292 = pneg %p291
      // Predicated region
      $region9: #{tpu_custom_call.1} parent=5 // pred_check
        _
      $region10: #{tpu_custom_call.1} parent=5 // pred_check_branch
        %294 = sbr.rel (%p291) target = $region12
      $region11: #{tpu_custom_call.1} parent=5 // pred_region
        %s295 = ssub.s32 %s19, 1
        // Predicated region
        $region13: #{tpu_custom_call.1} parent=11 // pred_check
          %p296 = pneg %p66
        $region14: #{tpu_custom_call.1} parent=11 // pred_check_branch
          %298 = sbr.rel (%p296) target = $region16
        $region15: #{tpu_custom_call.1} parent=11 // pred_region
          %s300 = ssub.s32 12032, 12032
          %301 = vsyncadd [#allocation3], %s300
          %s302 = sshll.u32 [#allocation2], 4
          %s303 = int_to_ptr.vmem [resolvable:$true] %s302
          %308 = dma.hbm_to_vmem [thread:$0]  %s1, 12032, %s303, [#allocation3], 256, 256, 16
        $region16: #{tpu_custom_call.1} parent=11 // pred_fallthru
          _
        // Predicated region
        $region17: #{tpu_custom_call.1} parent=11 // pred_check
          %p309 = pneg %p87
        $region18: #{tpu_custom_call.1} parent=11 // pred_check_branch
          %311 = sbr.rel (%p309) target = $region20
        $region19: #{tpu_custom_call.1} parent=11 // pred_region
          _
        $region20: #{tpu_custom_call.1} parent=11 // pred_fallthru
          _
        // Predicated region
        $region21: #{tpu_custom_call.1} parent=11 // pred_check
          %p312 = pneg %p108
        $region22: #{tpu_custom_call.1} parent=11 // pred_check_branch
          %314 = sbr.rel (%p312) target = $region24
        $region23: #{tpu_custom_call.1} parent=11 // pred_region
          %s316 = ssub.s32 9216, 9216
          %317 = vsyncadd [#allocation5], %s316
          %s318 = sshll.u32 [#allocation4], 4
          %s319 = int_to_ptr.vmem [resolvable:$true] %s318
          %324 = dma.hbm_to_vmem [thread:$0]  %s3, 9216, %s319, [#allocation5], 384, 384, 24
        $region24: #{tpu_custom_call.1} parent=11 // pred_fallthru
          _
        // Predicated region
        $region25: #{tpu_custom_call.1} parent=11 // pred_check
          %p325 = pneg %p129
        $region26: #{tpu_custom_call.1} parent=11 // pred_check_branch
          %327 = sbr.rel (%p325) target = $region28
        $region27: #{tpu_custom_call.1} parent=11 // pred_region
          _
        $region28: #{tpu_custom_call.1} parent=11 // pred_fallthru
          _
        // Predicated region
        $region29: #{tpu_custom_call.1} parent=11 // pred_check
          %p328 = pneg %p150
        $region30: #{tpu_custom_call.1} parent=11 // pred_check_branch
          %330 = sbr.rel (%p328) target = $region32
        $region31: #{tpu_custom_call.1} parent=11 // pred_region
          _
        $region32: #{tpu_custom_call.1} parent=11 // pred_fallthru
          _
        // Predicated region
        $region33: #{tpu_custom_call.1} parent=11 // pred_check
          %p331 = pneg %p171
        $region34: #{tpu_custom_call.1} parent=11 // pred_check_branch
          %333 = sbr.rel (%p331) target = $region36
        $region35: #{tpu_custom_call.1} parent=11 // pred_region
          _
        $region36: #{tpu_custom_call.1} parent=11 // pred_fallthru
          _
        // Predicated region
        $region37: #{tpu_custom_call.1} parent=11 // pred_check
          %p334 = pneg %p192
        $region38: #{tpu_custom_call.1} parent=11 // pred_check_branch
          %336 = sbr.rel (%p334) target = $region40
        $region39: #{tpu_custom_call.1} parent=11 // pred_region
          _
        $region40: #{tpu_custom_call.1} parent=11 // pred_fallthru
          _
        // Predicated region
        $region41: #{tpu_custom_call.1} parent=11 // pred_check
          %p337 = pneg %p213
        $region42: #{tpu_custom_call.1} parent=11 // pred_check_branch
          %339 = sbr.rel (%p337) target = $region44
        $region43: #{tpu_custom_call.1} parent=11 // pred_region
          _
        $region44: #{tpu_custom_call.1} parent=11 // pred_fallthru
          _
        // Predicated region
        $region45: #{tpu_custom_call.1} parent=11 // pred_check
          %p340 = pneg %p234
        $region46: #{tpu_custom_call.1} parent=11 // pred_check_branch
          %342 = sbr.rel (%p340) target = $region48
        $region47: #{tpu_custom_call.1} parent=11 // pred_region
          _
        $region48: #{tpu_custom_call.1} parent=11 // pred_fallthru
          _
        // Predicated region
        $region49: #{tpu_custom_call.1} parent=11 // pred_check
          %p343 = pneg %p255
        $region50: #{tpu_custom_call.1} parent=11 // pred_check_branch
          %345 = sbr.rel (%p343) target = $region52
        $region51: #{tpu_custom_call.1} parent=11 // pred_region
          _
        $region52: #{tpu_custom_call.1} parent=11 // pred_fallthru
          _
      $region12: #{tpu_custom_call.1} parent=5 // pred_fallthru
        _
      %p346 = scmp.lt.s32.totalorder %s19, 2
      // Predicated region
      $region53: #{tpu_custom_call.1} parent=5 // pred_check
        %p347 = pneg %p346
      $region54: #{tpu_custom_call.1} parent=5 // pred_check_branch
        %349 = sbr.rel (%p347) target = $region56
      $region55: #{tpu_custom_call.1} parent=5 // pred_region
        // Predicated region
        $region57: #{tpu_custom_call.1} parent=55 // pred_check
          %p350 = pneg %p39
        $region58: #{tpu_custom_call.1} parent=55 // pred_check_branch
          %352 = sbr.rel (%p350) target = $region60
        $region59: #{tpu_custom_call.1} parent=55 // pred_region
          %p353 = scmp.lt.s32.totalorder %s19, 1
          %s354 = scalar_select %p353, %s19, 1
          %s355 = smul.addr %s354, 3
          %s356 = smul.addr %s355, 8
          %s357 = scalar_lea.vmem %s0, %s356
        $region60: #{tpu_custom_call.1} parent=55 // pred_fallthru
          _
      $region56: #{tpu_custom_call.1} parent=5 // pred_fallthru
        _
      %p358 = scmp.le.s32.totalorder 1, %s19
      %p359 = scmp.lt.s32.totalorder %s19, 3
      %p360 = pnand %p358, %p359
      %p361 = pneg %p360
      // Predicated region
      $region61: #{tpu_custom_call.1} parent=5 // pred_check
        _
      $region62: #{tpu_custom_call.1} parent=5 // pred_check_branch
        %363 = sbr.rel (%p360) target = $region64
      $region63: #{tpu_custom_call.1} parent=5 // pred_region
        %s364 = ssub.s32 %s19, 1
        // Predicated region
        $region65: #{tpu_custom_call.1} parent=63 // pred_check
          %p365 = pneg %p66
        $region66: #{tpu_custom_call.1} parent=63 // pred_check_branch
          %367 = sbr.rel (%p365) target = $region68
        $region67: #{tpu_custom_call.1} parent=63 // pred_region
          %368 = dma.done [#allocation3], 12032
        $region68: #{tpu_custom_call.1} parent=63 // pred_fallthru
          _
        // Predicated region
        $region69: #{tpu_custom_call.1} parent=63 // pred_check
          %p369 = pneg %p108
        $region70: #{tpu_custom_call.1} parent=63 // pred_check_branch
          %371 = sbr.rel (%p369) target = $region72
        $region71: #{tpu_custom_call.1} parent=63 // pred_region
          %372 = dma.done [#allocation5], 9216
        $region72: #{tpu_custom_call.1} parent=63 // pred_fallthru
          _
        %p373 = scmp.lt.s32.totalorder %s24, 1
        %s374 = scalar_select %p373, %s24, 1
        %s375 = smul.addr %s374, 3
        %s376 = smul.addr %s375, 8
        %s377 = scalar_lea.vmem %s0, %s376
        %p378 = pneg %p45
        %p379 = pneg %p42
        %p380 = pneg %p66
        %p381 = pneg %p63
        %p382 = pneg %p87
        %p383 = pneg %p84
        %p384 = pneg %p108
        %p385 = pneg %p105
        %p386 = pneg %p129
        %p387 = pneg %p126
        %p388 = pneg %p150
        %p389 = pneg %p147
        %p390 = pneg %p171
        %p391 = pneg %p168
        %p392 = pneg %p192
        %p393 = pneg %p189
        %p394 = pneg %p213
        %p395 = pneg %p210
        %p396 = pneg %p234
        %p397 = pneg %p231
        %p398 = pneg %p255
        %p399 = pneg %p252
        %p400 = pneg %p281
        %p401 = pneg %p278
        %p402 = scmp.lt.s32.totalorder %s24, 1
        %s403 = scalar_select %p402, %s24, 1
        %s404 = smul.addr %s403, 8
        %s405 = scalar_lea.vmem %s11, %s404
        %p406 = scmp.lt.s32.totalorder %s24, 1
        %s407 = scalar_select %p406, %s24, 1
        %s408 = smul.addr %s407, 3
        %s409 = smul.addr %s408, 8
        %s410 = scalar_lea.vmem %s0, %s409
        %p411 = scmp.lt.s32.totalorder %s24, 1
        %s412 = scalar_select %p411, %s24, 1
        %s413 = smul.addr %s412, 8
        %s414 = scalar_lea.vmem %s11, %s413
        %v416 = vld [vmem:[%s410] sm:$0xff]
        %v417 = vld [vmem:[%s410 + $0x8] sm:$0xff]
        %v418 = vld [vmem:[%s410 + $0x10] sm:$0xff]
        %v419 = vpack.c.bf16 %v416, %v416
        %v420 = vpack.c.bf16 %v417, %v417
        %v421 = vpack.c.bf16 %v418, %v418
        %v422 = vld [vmem:[#allocation2] sm:$0xff]
        %v423 = vld [vmem:[#allocation2 + $0x8] sm:$0xff]
        %v424 = vld [vmem:[#allocation2 + $0x10] sm:$0xff]
        %v425 = vld [vmem:[#allocation2 + $0x18] sm:$0xff]
        %v426 = vld [vmem:[#allocation2 + $0x20] sm:$0xff]
        %v427 = vld [vmem:[#allocation2 + $0x28] sm:$0xff]
        %v428 = vld [vmem:[#allocation2 + $0x30] sm:$0xff]
        %v429 = vld [vmem:[#allocation2 + $0x38] sm:$0xff]
        %v430 = vld [vmem:[#allocation2 + $0x40] sm:$0xff]
        %v431 = vld [vmem:[#allocation2 + $0x48] sm:$0xff]
        %v432 = vld [vmem:[#allocation2 + $0x50] sm:$0xff]
        %v433 = vld [vmem:[#allocation2 + $0x58] sm:$0xff]
        %v434 = vld [vmem:[#allocation2 + $0x60] sm:$0xff]
        %v435 = vld [vmem:[#allocation2 + $0x68] sm:$0xff]
        %v436 = vld [vmem:[#allocation2 + $0x70] sm:$0xff]
        %v437 = vld [vmem:[#allocation2 + $0x78] sm:$0xff]
        %v438 = vld [vmem:[#allocation2 + $0x80] sm:$0xff]
        %v439 = vld [vmem:[#allocation2 + $0x88] sm:$0xff]
        %v440 = vld [vmem:[#allocation2 + $0x90] sm:$0xff]
        %v441 = vld [vmem:[#allocation2 + $0x98] sm:$0xff]
        %v442 = vld [vmem:[#allocation2 + $0xa0] sm:$0xff]
        %v443 = vld [vmem:[#allocation2 + $0xa8] sm:$0xff]
        %v444 = vld [vmem:[#allocation2 + $0xb0] sm:$0xff]
        %v445 = vld [vmem:[#allocation2 + $0xb8] sm:$0xff]
        %v446 = vld [vmem:[#allocation2 + $0xc0] sm:$0xff]
        %v447 = vld [vmem:[#allocation2 + $0xc8] sm:$0xff]
        %v448 = vld [vmem:[#allocation2 + $0xd0] sm:$0xff]
        %v449 = vld [vmem:[#allocation2 + $0xd8] sm:$0xff]
        %v450 = vld [vmem:[#allocation2 + $0xe0] sm:$0xff]
        %v451 = vld [vmem:[#allocation2 + $0xe8] sm:$0xff]
        %v452 = vld [vmem:[#allocation2 + $0xf0] sm:$0xff]
        %v453 = vld [vmem:[#allocation2 + $0xf8] sm:$0xff]
        %v454 = vld [vmem:[#allocation2 + $0x100] sm:$0xff]
        %v455 = vld [vmem:[#allocation2 + $0x108] sm:$0xff]
        %v456 = vld [vmem:[#allocation2 + $0x110] sm:$0xff]
        %v457 = vld [vmem:[#allocation2 + $0x118] sm:$0xff]
        %v458 = vld [vmem:[#allocation2 + $0x120] sm:$0xff]
        %v459 = vld [vmem:[#allocation2 + $0x128] sm:$0xff]
        %v460 = vld [vmem:[#allocation2 + $0x130] sm:$0xff]
        %v461 = vld [vmem:[#allocation2 + $0x138] sm:$0xff]
        %v462 = vld [vmem:[#allocation2 + $0x140] sm:$0xff]
        %v463 = vld [vmem:[#allocation2 + $0x148] sm:$0xff]
        %v464 = vld [vmem:[#allocation2 + $0x150] sm:$0xff]
        %v465 = vld [vmem:[#allocation2 + $0x158] sm:$0xff]
        %v466 = vld [vmem:[#allocation2 + $0x160] sm:$0xff]
        %v467 = vld [vmem:[#allocation2 + $0x168] sm:$0xff]
        %v468 = vld [vmem:[#allocation2 + $0x170] sm:$0xff]
        %v469 = vld [vmem:[#allocation2 + $0x178] sm:$0xff]
        %v470 = vld [vmem:[#allocation2 + $0x180] sm:$0xff]
        %v471 = vld [vmem:[#allocation2 + $0x188] sm:$0xff]
        %v472 = vld [vmem:[#allocation2 + $0x190] sm:$0xff]
        %v473 = vld [vmem:[#allocation2 + $0x198] sm:$0xff]
        %v474 = vld [vmem:[#allocation2 + $0x1a0] sm:$0xff]
        %v475 = vld [vmem:[#allocation2 + $0x1a8] sm:$0xff]
        %v476 = vld [vmem:[#allocation2 + $0x1b0] sm:$0xff]
        %v477 = vld [vmem:[#allocation2 + $0x1b8] sm:$0xff]
        %v478 = vld [vmem:[#allocation2 + $0x1c0] sm:$0xff]
        %v479 = vld [vmem:[#allocation2 + $0x1c8] sm:$0xff]
        %v480 = vld [vmem:[#allocation2 + $0x1d0] sm:$0xff]
        %v481 = vld [vmem:[#allocation2 + $0x1d8] sm:$0xff]
        %v482 = vld [vmem:[#allocation2 + $0x1e0] sm:$0xff]
        %v483 = vld [vmem:[#allocation2 + $0x1e8] sm:$0xff]
        %v484 = vld [vmem:[#allocation2 + $0x1f0] sm:$0xff]
        %v485 = vld [vmem:[#allocation2 + $0x1f8] sm:$0xff]
        %v486 = vld [vmem:[#allocation2 + $0x200] sm:$0xff]
        %v487 = vld [vmem:[#allocation2 + $0x208] sm:$0xff]
        %v488 = vld [vmem:[#allocation2 + $0x210] sm:$0xff]
        %v489 = vld [vmem:[#allocation2 + $0x218] sm:$0xff]
        %v490 = vld [vmem:[#allocation2 + $0x220] sm:$0xff]
        %v491 = vld [vmem:[#allocation2 + $0x228] sm:$0xff]
        %v492 = vld [vmem:[#allocation2 + $0x230] sm:$0xff]
        %v493 = vld [vmem:[#allocation2 + $0x238] sm:$0xff]
        %v494 = vld [vmem:[#allocation2 + $0x240] sm:$0xff]
        %v495 = vld [vmem:[#allocation2 + $0x248] sm:$0xff]
        %v496 = vld [vmem:[#allocation2 + $0x250] sm:$0xff]
        %v497 = vld [vmem:[#allocation2 + $0x258] sm:$0xff]
        %v498 = vld [vmem:[#allocation2 + $0x260] sm:$0xff]
        %v499 = vld [vmem:[#allocation2 + $0x268] sm:$0xff]
        %v500 = vld [vmem:[#allocation2 + $0x270] sm:$0xff]
        %v501 = vld [vmem:[#allocation2 + $0x278] sm:$0xff]
        %v502 = vld [vmem:[#allocation2 + $0x280] sm:$0xff]
        %v503 = vld [vmem:[#allocation2 + $0x288] sm:$0xff]
        %v504 = vld [vmem:[#allocation2 + $0x290] sm:$0xff]
        %v505 = vld [vmem:[#allocation2 + $0x298] sm:$0xff]
        %v506 = vld [vmem:[#allocation2 + $0x2a0] sm:$0xff]
        %v507 = vld [vmem:[#allocation2 + $0x2a8] sm:$0xff]
        %v508 = vld [vmem:[#allocation2 + $0x2b0] sm:$0xff]
        %v509 = vld [vmem:[#allocation2 + $0x2b8] sm:$0xff]
        %v510 = vld [vmem:[#allocation2 + $0x2c0] sm:$0xff]
        %v511 = vld [vmem:[#allocation2 + $0x2c8] sm:$0xff]
        %v512 = vld [vmem:[#allocation2 + $0x2d0] sm:$0xff]
        %v513 = vld [vmem:[#allocation2 + $0x2d8] sm:$0xff]
        %v514 = vld [vmem:[#allocation2 + $0x2e0] sm:$0xff]
        %v515 = vld [vmem:[#allocation2 + $0x2e8] sm:$0xff]
        %v516 = vld [vmem:[%s2] sm:$0xf]
        %v518 = vlaneseq
        %v519 = vshrl.u32 %v518, 7
        %v520 = vsub.s32 0, %v519
        %v521 = vrot.slane %v516, %v520
        %v522 = vlaneseq
        %v523 = vshrl.u32 %v522, 7
        %v524 = vsub.s32 1, %v523
        %v525 = vrot.slane %v516, %v524
        %v526 = vlaneseq
        %v527 = vshrl.u32 %v526, 7
        %v528 = vsub.s32 2, %v527
        %v529 = vrot.slane %v516, %v528
        %v530 = vlaneseq
        %v531 = vshrl.u32 %v530, 7
        %v532 = vsub.s32 3, %v531
        %v533 = vrot.slane %v516, %v532
        %v632 = vunpack.c.l.b16 %v422
        %v633 = vunpack.c.h.b16 %v422
        %v634 = vunpack.c.l.b16 %v423
        %v635 = vunpack.c.h.b16 %v423
        %v636 = vunpack.c.l.b16 %v424
        %v637 = vunpack.c.h.b16 %v424
        %v638 = vunpack.c.l.b16 %v425
        %v639 = vunpack.c.h.b16 %v425
        %v640 = vunpack.c.l.b16 %v426
        %v641 = vunpack.c.h.b16 %v426
        %v642 = vunpack.c.l.b16 %v427
        %v643 = vunpack.c.h.b16 %v427
        %v644 = vunpack.c.l.b16 %v428
        %v645 = vunpack.c.h.b16 %v428
        %v646 = vunpack.c.l.b16 %v429
        %v647 = vunpack.c.h.b16 %v429
        %v648 = vunpack.c.l.b16 %v430
        %v649 = vunpack.c.h.b16 %v430
        %v650 = vunpack.c.l.b16 %v431
        %v651 = vunpack.c.h.b16 %v431
        %v652 = vunpack.c.l.b16 %v432
        %v653 = vunpack.c.h.b16 %v432
        %v654 = vunpack.c.l.b16 %v433
        %v655 = vunpack.c.h.b16 %v433
        %v656 = vunpack.c.l.b16 %v434
        %v657 = vunpack.c.h.b16 %v434
        %v658 = vunpack.c.l.b16 %v435
        %v659 = vunpack.c.h.b16 %v435
        %v660 = vunpack.c.l.b16 %v436
        %v661 = vunpack.c.h.b16 %v436
        %v662 = vunpack.c.l.b16 %v437
        %v663 = vunpack.c.h.b16 %v437
        %v664 = vunpack.c.l.b16 %v438
        %v665 = vunpack.c.h.b16 %v438
        %v666 = vunpack.c.l.b16 %v439
        %v667 = vunpack.c.h.b16 %v439
        %v668 = vunpack.c.l.b16 %v440
        %v669 = vunpack.c.h.b16 %v440
        %v670 = vunpack.c.l.b16 %v441
        %v671 = vunpack.c.h.b16 %v441
        %v672 = vunpack.c.l.b16 %v442
        %v673 = vunpack.c.h.b16 %v442
        %v674 = vunpack.c.l.b16 %v443
        %v675 = vunpack.c.h.b16 %v443
        %v676 = vunpack.c.l.b16 %v444
        %v677 = vunpack.c.h.b16 %v444
        %v678 = vunpack.c.l.b16 %v445
        %v679 = vunpack.c.h.b16 %v445
        %v680 = vunpack.c.l.b16 %v446
        %v681 = vunpack.c.h.b16 %v446
        %v682 = vunpack.c.l.b16 %v447
        %v683 = vunpack.c.h.b16 %v447
        %v684 = vunpack.c.l.b16 %v448
        %v685 = vunpack.c.h.b16 %v448
        %v686 = vunpack.c.l.b16 %v449
        %v687 = vunpack.c.h.b16 %v449
        %v688 = vunpack.c.l.b16 %v450
        %v689 = vunpack.c.h.b16 %v450
        %v690 = vunpack.c.l.b16 %v451
        %v691 = vunpack.c.h.b16 %v451
        %v692 = vunpack.c.l.b16 %v452
        %v693 = vunpack.c.h.b16 %v452
        %v694 = vunpack.c.l.b16 %v453
        %v695 = vunpack.c.h.b16 %v453
        %v696 = vunpack.c.l.b16 %v454
        %v697 = vunpack.c.h.b16 %v454
        %v698 = vunpack.c.l.b16 %v455
        %v699 = vunpack.c.h.b16 %v455
        %v700 = vunpack.c.l.b16 %v456
        %v701 = vunpack.c.h.b16 %v456
        %v702 = vunpack.c.l.b16 %v457
        %v703 = vunpack.c.h.b16 %v457
        %v704 = vunpack.c.l.b16 %v458
        %v705 = vunpack.c.h.b16 %v458
        %v706 = vunpack.c.l.b16 %v459
        %v707 = vunpack.c.h.b16 %v459
        %v708 = vunpack.c.l.b16 %v460
        %v709 = vunpack.c.h.b16 %v460
        %v710 = vunpack.c.l.b16 %v461
        %v711 = vunpack.c.h.b16 %v461
        %v712 = vunpack.c.l.b16 %v462
        %v713 = vunpack.c.h.b16 %v462
        %v714 = vunpack.c.l.b16 %v463
        %v715 = vunpack.c.h.b16 %v463
        %v716 = vunpack.c.l.b16 %v464
        %v717 = vunpack.c.h.b16 %v464
        %v718 = vunpack.c.l.b16 %v465
        %v719 = vunpack.c.h.b16 %v465
        %v720 = vunpack.c.l.b16 %v466
        %v721 = vunpack.c.h.b16 %v466
        %v722 = vunpack.c.l.b16 %v467
        %v723 = vunpack.c.h.b16 %v467
        %v724 = vunpack.c.l.b16 %v468
        %v725 = vunpack.c.h.b16 %v468
        %v726 = vunpack.c.l.b16 %v469
        %v727 = vunpack.c.h.b16 %v469
        %v728 = vunpack.c.l.b16 %v470
        %v729 = vunpack.c.h.b16 %v470
        %v730 = vunpack.c.l.b16 %v471
        %v731 = vunpack.c.h.b16 %v471
        %v732 = vunpack.c.l.b16 %v472
        %v733 = vunpack.c.h.b16 %v472
        %v734 = vunpack.c.l.b16 %v473
        %v735 = vunpack.c.h.b16 %v473
        %v736 = vunpack.c.l.b16 %v474
        %v737 = vunpack.c.h.b16 %v474
        %v738 = vunpack.c.l.b16 %v475
        %v739 = vunpack.c.h.b16 %v475
        %v740 = vunpack.c.l.b16 %v476
        %v741 = vunpack.c.h.b16 %v476
        %v742 = vunpack.c.l.b16 %v477
        %v743 = vunpack.c.h.b16 %v477
        %v744 = vunpack.c.l.b16 %v478
        %v745 = vunpack.c.h.b16 %v478
        %v746 = vunpack.c.l.b16 %v479
        %v747 = vunpack.c.h.b16 %v479
        %v748 = vunpack.c.l.b16 %v480
        %v749 = vunpack.c.h.b16 %v480
        %v750 = vunpack.c.l.b16 %v481
        %v751 = vunpack.c.h.b16 %v481
        %v752 = vunpack.c.l.b16 %v482
        %v753 = vunpack.c.h.b16 %v482
        %v754 = vunpack.c.l.b16 %v483
        %v755 = vunpack.c.h.b16 %v483
        %v756 = vunpack.c.l.b16 %v484
        %v757 = vunpack.c.h.b16 %v484
        %v758 = vunpack.c.l.b16 %v485
        %v759 = vunpack.c.h.b16 %v485
        %v760 = vunpack.c.l.b16 %v486
        %v761 = vunpack.c.h.b16 %v486
        %v762 = vunpack.c.l.b16 %v487
        %v763 = vunpack.c.h.b16 %v487
        %v764 = vunpack.c.l.b16 %v488
        %v765 = vunpack.c.h.b16 %v488
        %v766 = vunpack.c.l.b16 %v489
        %v767 = vunpack.c.h.b16 %v489
        %v768 = vunpack.c.l.b16 %v490
        %v769 = vunpack.c.h.b16 %v490
        %v770 = vunpack.c.l.b16 %v491
        %v771 = vunpack.c.h.b16 %v491
        %v772 = vunpack.c.l.b16 %v492
        %v773 = vunpack.c.h.b16 %v492
        %v774 = vunpack.c.l.b16 %v493
        %v775 = vunpack.c.h.b16 %v493
        %v776 = vunpack.c.l.b16 %v494
        %v777 = vunpack.c.h.b16 %v494
        %v778 = vunpack.c.l.b16 %v495
        %v779 = vunpack.c.h.b16 %v495
        %v780 = vunpack.c.l.b16 %v496
        %v781 = vunpack.c.h.b16 %v496
        %v782 = vunpack.c.l.b16 %v497
        %v783 = vunpack.c.h.b16 %v497
        %v784 = vunpack.c.l.b16 %v498
        %v785 = vunpack.c.h.b16 %v498
        %v786 = vunpack.c.l.b16 %v499
        %v787 = vunpack.c.h.b16 %v499
        %v788 = vunpack.c.l.b16 %v500
        %v789 = vunpack.c.h.b16 %v500
        %v790 = vunpack.c.l.b16 %v501
        %v791 = vunpack.c.h.b16 %v501
        %v792 = vunpack.c.l.b16 %v502
        %v793 = vunpack.c.h.b16 %v502
        %v794 = vunpack.c.l.b16 %v503
        %v795 = vunpack.c.h.b16 %v503
        %v796 = vunpack.c.l.b16 %v504
        %v797 = vunpack.c.h.b16 %v504
        %v798 = vunpack.c.l.b16 %v505
        %v799 = vunpack.c.h.b16 %v505
        %v800 = vunpack.c.l.b16 %v506
        %v801 = vunpack.c.h.b16 %v506
        %v802 = vunpack.c.l.b16 %v507
        %v803 = vunpack.c.h.b16 %v507
        %v804 = vunpack.c.l.b16 %v508
        %v805 = vunpack.c.h.b16 %v508
        %v806 = vunpack.c.l.b16 %v509
        %v807 = vunpack.c.h.b16 %v509
        %v808 = vunpack.c.l.b16 %v510
        %v809 = vunpack.c.h.b16 %v510
        %v810 = vunpack.c.l.b16 %v511
        %v811 = vunpack.c.h.b16 %v511
        %v812 = vunpack.c.l.b16 %v512
        %v813 = vunpack.c.h.b16 %v512
        %v814 = vunpack.c.l.b16 %v513
        %v815 = vunpack.c.h.b16 %v513
        %v816 = vunpack.c.l.b16 %v514
        %v817 = vunpack.c.h.b16 %v514
        %v818 = vunpack.c.l.b16 %v515
        %v819 = vunpack.c.h.b16 %v515
        %v820 = vpack.c.b16 %v636, %v632
        %v821 = vpack.c.b16 %v637, %v633
        %v822 = vpack.c.b16 %v638, %v634
        %v823 = vpack.c.b16 %v639, %v635
        %v824 = vpack.c.b16 %v644, %v640
        %v825 = vpack.c.b16 %v645, %v641
        %v826 = vpack.c.b16 %v646, %v642
        %v827 = vpack.c.b16 %v647, %v643
        %v828 = vpack.c.b16 %v652, %v648
        %v829 = vpack.c.b16 %v653, %v649
        %v830 = vpack.c.b16 %v654, %v650
        %v831 = vpack.c.b16 %v655, %v651
        %v832 = vpack.c.b16 %v660, %v656
        %v833 = vpack.c.b16 %v661, %v657
        %v834 = vpack.c.b16 %v662, %v658
        %v835 = vpack.c.b16 %v663, %v659
        %v836 = vpack.c.b16 %v668, %v664
        %v837 = vpack.c.b16 %v669, %v665
        %v838 = vpack.c.b16 %v670, %v666
        %v839 = vpack.c.b16 %v671, %v667
        %v840 = vpack.c.b16 %v676, %v672
        %v841 = vpack.c.b16 %v677, %v673
        %v842 = vpack.c.b16 %v678, %v674
        %v843 = vpack.c.b16 %v679, %v675
        %v844 = vpack.c.b16 %v684, %v680
        %v845 = vpack.c.b16 %v685, %v681
        %v846 = vpack.c.b16 %v686, %v682
        %v847 = vpack.c.b16 %v687, %v683
        %v848 = vpack.c.b16 %v692, %v688
        %v849 = vpack.c.b16 %v693, %v689
        %v850 = vpack.c.b16 %v694, %v690
        %v851 = vpack.c.b16 %v695, %v691
        %v852 = vpack.c.b16 %v700, %v696
        %v853 = vpack.c.b16 %v701, %v697
        %v854 = vpack.c.b16 %v702, %v698
        %v855 = vpack.c.b16 %v703, %v699
        %v856 = vpack.c.b16 %v708, %v704
        %v857 = vpack.c.b16 %v709, %v705
        %v858 = vpack.c.b16 %v710, %v706
        %v859 = vpack.c.b16 %v711, %v707
        %v860 = vpack.c.b16 %v716, %v712
        %v861 = vpack.c.b16 %v717, %v713
        %v862 = vpack.c.b16 %v718, %v714
        %v863 = vpack.c.b16 %v719, %v715
        %v864 = vpack.c.b16 %v724, %v720
        %v865 = vpack.c.b16 %v725, %v721
        %v866 = vpack.c.b16 %v726, %v722
        %v867 = vpack.c.b16 %v727, %v723
        %v868 = vpack.c.b16 %v732, %v728
        %v869 = vpack.c.b16 %v733, %v729
        %v870 = vpack.c.b16 %v734, %v730
        %v871 = vpack.c.b16 %v735, %v731
        %v872 = vpack.c.b16 %v740, %v736
        %v873 = vpack.c.b16 %v741, %v737
        %v874 = vpack.c.b16 %v742, %v738
        %v875 = vpack.c.b16 %v743, %v739
        %v876 = vpack.c.b16 %v748, %v744
        %v877 = vpack.c.b16 %v749, %v745
        %v878 = vpack.c.b16 %v750, %v746
        %v879 = vpack.c.b16 %v751, %v747
        %v880 = vpack.c.b16 %v756, %v752
        %v881 = vpack.c.b16 %v757, %v753
        %v882 = vpack.c.b16 %v758, %v754
        %v883 = vpack.c.b16 %v759, %v755
        %v884 = vpack.c.b16 %v764, %v760
        %v885 = vpack.c.b16 %v765, %v761
        %v886 = vpack.c.b16 %v766, %v762
        %v887 = vpack.c.b16 %v767, %v763
        %v888 = vpack.c.b16 %v772, %v768
        %v889 = vpack.c.b16 %v773, %v769
        %v890 = vpack.c.b16 %v774, %v770
        %v891 = vpack.c.b16 %v775, %v771
        %v892 = vpack.c.b16 %v780, %v776
        %v893 = vpack.c.b16 %v781, %v777
        %v894 = vpack.c.b16 %v782, %v778
        %v895 = vpack.c.b16 %v783, %v779
        %v896 = vpack.c.b16 %v788, %v784
        %v897 = vpack.c.b16 %v789, %v785
        %v898 = vpack.c.b16 %v790, %v786
        %v899 = vpack.c.b16 %v791, %v787
        %v900 = vpack.c.b16 %v796, %v792
        %v901 = vpack.c.b16 %v797, %v793
        %v902 = vpack.c.b16 %v798, %v794
        %v903 = vpack.c.b16 %v799, %v795
        %v904 = vpack.c.b16 %v804, %v800
        %v905 = vpack.c.b16 %v805, %v801
        %v906 = vpack.c.b16 %v806, %v802
        %v907 = vpack.c.b16 %v807, %v803
        %v908 = vpack.c.b16 %v812, %v808
        %v909 = vpack.c.b16 %v813, %v809
        %v910 = vpack.c.b16 %v814, %v810
        %v911 = vpack.c.b16 %v815, %v811
        %v912 = vpack.c.b16 %v816, %v816
        %v913 = vpack.c.b16 %v817, %v817
        %v914 = vpack.c.b16 %v818, %v818
        %v915 = vpack.c.b16 %v819, %v819
        %vm1008 = vcmask 973824
        %v1010 = vsel %vm1008, %v421, 0
        %vm1012 = vcmask 1042432
        %vm1013 = vcmask 1043456
        %v1014 = vsel %vm1012, 4294967295, 65535
        %v1015 = vsel %vm1013, %v1014, 0
        %v1017 = vand.u32 %v912, %v1015
        %v1020 = vand.u32 %v913, %v1015
        %v1023 = vand.u32 %v914, %v1015
        %v1026 = vand.u32 %v915, %v1015
        %1028 = vmatprep.subr.bf16.mxu0 %v821
        %1029 = vmatpush1.bf16.msra.mxu0 %v820
        %1030 = vmatprep.subr.bf16.mxu0 %v825
        %1031 = vmatpush1.bf16.msra.mxu0 %v824
        %1032 = vmatprep.subr.bf16.mxu0 %v829
        %1033 = vmatpush1.bf16.msra.mxu0 %v828
        %1034 = vmatprep.subr.bf16.mxu0 %v833
        %1035 = vmatpush1.bf16.msra.mxu0 %v832
        %1036 = vmatprep.subr.bf16.mxu0 %v837
        %1037 = vmatpush1.bf16.msra.mxu0 %v836
        %1038 = vmatprep.subr.bf16.mxu0 %v841
        %1039 = vmatpush1.bf16.msra.mxu0 %v840
        %1040 = vmatprep.subr.bf16.mxu0 %v845
        %1041 = vmatpush1.bf16.msra.mxu0 %v844
        %1042 = vmatprep.subr.bf16.mxu0 %v849
        %1043 = vmatpush1.bf16.msra.mxu0 %v848
        %1044 = vmatprep.subr.bf16.mxu0 %v853
        %1045 = vmatpush1.bf16.msra.mxu0 %v852
        %1046 = vmatprep.subr.bf16.mxu0 %v857
        %1047 = vmatpush1.bf16.msra.mxu0 %v856
        %1048 = vmatprep.subr.bf16.mxu0 %v861
        %1049 = vmatpush1.bf16.msra.mxu0 %v860
        %1050 = vmatprep.subr.bf16.mxu0 %v865
        %1051 = vmatpush1.bf16.msra.mxu0 %v864
        %1052 = vmatprep.subr.bf16.mxu0 %v869
        %1053 = vmatpush1.bf16.msra.mxu0 %v868
        %1054 = vmatprep.subr.bf16.mxu0 %v873
        %1055 = vmatpush1.bf16.msra.mxu0 %v872
        %1056 = vmatprep.subr.bf16.mxu0 %v877
        %1057 = vmatpush1.bf16.msra.mxu0 %v876
        %1058 = vmatprep.subr.bf16.mxu0 %v881
        %1059 = vmatpush1.bf16.msra.mxu0 %v880
        %1060 = vmatprep.mubr.bf16.mxu0 %v420
        %1061 = vmatmul.mubr.bf16.gmra.mrb[0].mxu0 %v419
        %v1062 = vpop.f32.mrb[0].mxu0
        %v1063 = vadd.f32 %v521, %v1062
        %v1064 = vpop.f32.mrb[0].mxu0
        %v1065 = vadd.f32 %v525, %v1064
        %v1066 = vpop.f32.mrb[0].mxu0
        %v1067 = vpop.f32.mrb[0].mxu0
        %1068 = vdwg.mxu0
        %1069 = vmatprep.subr.bf16.mxu0 %v885
        %1070 = vmatpush1.bf16.msra.mxu0 %v884
        %1071 = vmatprep.subr.bf16.mxu0 %v889
        %1072 = vmatpush1.bf16.msra.mxu0 %v888
        %1073 = vmatprep.subr.bf16.mxu0 %v893
        %1074 = vmatpush1.bf16.msra.mxu0 %v892
        %1075 = vmatprep.subr.bf16.mxu0 %v897
        %1076 = vmatpush1.bf16.msra.mxu0 %v896
        %1077 = vmatprep.subr.bf16.mxu0 %v901
        %1078 = vmatpush1.bf16.msra.mxu0 %v900
        %1079 = vmatprep.subr.bf16.mxu0 %v905
        %1080 = vmatpush1.bf16.msra.mxu0 %v904
        %1081 = vmatprep.subr.bf16.mxu0 %v909
        %1082 = vmatpush1.bf16.msra.mxu0 %v908
        %1083 = vmatprep.subr.bf16.mxu0 %v1020
        %1084 = vmatpush1.bf16.msra.mxu0 %v1017
        %1085 = vmatprep.subr.bf16.mxu0 0
        %1086 = vmatpush1.bf16.msra.mxu0 0
        %1087 = vmatprep.subr.bf16.mxu0 0
        %1088 = vmatpush1.bf16.msra.mxu0 0
        %1089 = vmatprep.subr.bf16.mxu0 0
        %1090 = vmatpush1.bf16.msra.mxu0 0
        %1091 = vmatprep.subr.bf16.mxu0 0
        %1092 = vmatpush1.bf16.msra.mxu0 0
        %1093 = vmatprep.subr.bf16.mxu0 0
        %1094 = vmatpush1.bf16.msra.mxu0 0
        %1095 = vmatprep.subr.bf16.mxu0 0
        %1096 = vmatpush1.bf16.msra.mxu0 0
        %1097 = vmatprep.subr.bf16.mxu0 0
        %1098 = vmatpush1.bf16.msra.mxu0 0
        %1099 = vmatprep.subr.bf16.mxu0 0
        %1100 = vmatpush1.bf16.msra.mxu0 0
        %1101 = vmatprep.mubr.bf16.mxu0 0
        %1102 = vmatmul.mubr.bf16.gmra.mrb[0].mxu0 %v1010
        %v1103 = vpop.f32.mrb[0].mxu0
        %v1104 = vadd.f32 %v1063, %v1103
        %v1105 = vpop.f32.mrb[0].mxu0
        %v1106 = vadd.f32 %v1065, %v1105
        %v1107 = vpop.f32.mrb[0].mxu0
        %v1108 = vpop.f32.mrb[0].mxu0
        %1109 = vdwg.mxu0
        %1110 = vmatprep.subr.bf16.mxu0 %v823
        %1111 = vmatpush1.bf16.msra.mxu0 %v822
        %1112 = vmatprep.subr.bf16.mxu0 %v827
        %1113 = vmatpush1.bf16.msra.mxu0 %v826
        %1114 = vmatprep.subr.bf16.mxu0 %v831
        %1115 = vmatpush1.bf16.msra.mxu0 %v830
        %1116 = vmatprep.subr.bf16.mxu0 %v835
        %1117 = vmatpush1.bf16.msra.mxu0 %v834
        %1118 = vmatprep.subr.bf16.mxu0 %v839
        %1119 = vmatpush1.bf16.msra.mxu0 %v838
        %1120 = vmatprep.subr.bf16.mxu0 %v843
        %1121 = vmatpush1.bf16.msra.mxu0 %v842
        %1122 = vmatprep.subr.bf16.mxu0 %v847
        %1123 = vmatpush1.bf16.msra.mxu0 %v846
        %1124 = vmatprep.subr.bf16.mxu0 %v851
        %1125 = vmatpush1.bf16.msra.mxu0 %v850
        %1126 = vmatprep.subr.bf16.mxu0 %v855
        %1127 = vmatpush1.bf16.msra.mxu0 %v854
        %1128 = vmatprep.subr.bf16.mxu0 %v859
        %1129 = vmatpush1.bf16.msra.mxu0 %v858
        %1130 = vmatprep.subr.bf16.mxu0 %v863
        %1131 = vmatpush1.bf16.msra.mxu0 %v862
        %1132 = vmatprep.subr.bf16.mxu0 %v867
        %1133 = vmatpush1.bf16.msra.mxu0 %v866
        %1134 = vmatprep.subr.bf16.mxu0 %v871
        %1135 = vmatpush1.bf16.msra.mxu0 %v870
        %1136 = vmatprep.subr.bf16.mxu0 %v875
        %1137 = vmatpush1.bf16.msra.mxu0 %v874
        %1138 = vmatprep.subr.bf16.mxu0 %v879
        %1139 = vmatpush1.bf16.msra.mxu0 %v878
        %1140 = vmatprep.subr.bf16.mxu0 %v883
        %1141 = vmatpush1.bf16.msra.mxu0 %v882
        %1142 = vmatprep.mubr.bf16.mxu0 %v420
        %1143 = vmatmul.mubr.bf16.gmra.mrb[0].mxu0 %v419
        %v1144 = vpop.f32.mrb[0].mxu0
        %v1145 = vadd.f32 %v529, %v1144
        %v1146 = vpop.f32.mrb[0].mxu0
        %v1147 = vadd.f32 %v533, %v1146
        %v1148 = vpop.f32.mrb[0].mxu0
        %v1149 = vpop.f32.mrb[0].mxu0
        %1150 = vdwg.mxu0
        %1151 = vmatprep.subr.bf16.mxu0 %v887
        %1152 = vmatpush1.bf16.msra.mxu0 %v886
        %1153 = vmatprep.subr.bf16.mxu0 %v891
        %1154 = vmatpush1.bf16.msra.mxu0 %v890
        %1155 = vmatprep.subr.bf16.mxu0 %v895
        %1156 = vmatpush1.bf16.msra.mxu0 %v894
        %1157 = vmatprep.subr.bf16.mxu0 %v899
        %1158 = vmatpush1.bf16.msra.mxu0 %v898
        %1159 = vmatprep.subr.bf16.mxu0 %v903
        %1160 = vmatpush1.bf16.msra.mxu0 %v902
        %1161 = vmatprep.subr.bf16.mxu0 %v907
        %1162 = vmatpush1.bf16.msra.mxu0 %v906
        %1163 = vmatprep.subr.bf16.mxu0 %v911
        %1164 = vmatpush1.bf16.msra.mxu0 %v910
        %1165 = vmatprep.subr.bf16.mxu0 %v1026
        %1166 = vmatpush1.bf16.msra.mxu0 %v1023
        %1167 = vmatprep.subr.bf16.mxu0 0
        %1168 = vmatpush1.bf16.msra.mxu0 0
        %1169 = vmatprep.subr.bf16.mxu0 0
        %1170 = vmatpush1.bf16.msra.mxu0 0
        %1171 = vmatprep.subr.bf16.mxu0 0
        %1172 = vmatpush1.bf16.msra.mxu0 0
        %1173 = vmatprep.subr.bf16.mxu0 0
        %1174 = vmatpush1.bf16.msra.mxu0 0
        %1175 = vmatprep.subr.bf16.mxu0 0
        %1176 = vmatpush1.bf16.msra.mxu0 0
        %1177 = vmatprep.subr.bf16.mxu0 0
        %1178 = vmatpush1.bf16.msra.mxu0 0
        %1179 = vmatprep.subr.bf16.mxu0 0
        %1180 = vmatpush1.bf16.msra.mxu0 0
        %1181 = vmatprep.subr.bf16.mxu0 0
        %1182 = vmatpush1.bf16.msra.mxu0 0
        %1183 = vmatprep.mubr.bf16.mxu0 0
        %1184 = vmatmul.mubr.bf16.gmra.mrb[0].mxu0 %v1010
        %v1185 = vpop.f32.mrb[0].mxu0
        %v1186 = vadd.f32 %v1145, %v1185
        %v1187 = vpop.f32.mrb[0].mxu0
        %v1188 = vadd.f32 %v1147, %v1187
        %v1189 = vpop.f32.mrb[0].mxu0
        %v1190 = vpop.f32.mrb[0].mxu0
        %1191 = vdwg.mxu0
        %v1192 = vmax.f32 %v1104, 0.0
        %v1193 = vmax.f32 %v1106, 0.0
        %v1194 = vmax.f32 %v1186, 0.0
        %v1195 = vmax.f32 %v1188, 0.0
        %v1196 = vmax.f32 %v1192, %v1194
        %v1197 = vmax.f32 %v1193, %v1195
        %v1198 = vpack.c.bf16 %v1196, %v1196
        %v1199 = vpack.c.bf16 %v1197, %v1197
        %v1200 = vld [vmem:[#allocation4] sm:$0xff]
        %v1201 = vld [vmem:[#allocation4 + $0x8] sm:$0xff]
        %v1202 = vld [vmem:[#allocation4 + $0x10] sm:$0xff]
        %v1203 = vld [vmem:[#allocation4 + $0x18] sm:$0xff]
        %v1204 = vld [vmem:[#allocation4 + $0x20] sm:$0xff]
        %v1205 = vld [vmem:[#allocation4 + $0x28] sm:$0xff]
        %v1206 = vld [vmem:[#allocation4 + $0x30] sm:$0xff]
        %v1207 = vld [vmem:[#allocation4 + $0x38] sm:$0xff]
        %v1208 = vld [vmem:[#allocation4 + $0x40] sm:$0xff]
        %v1209 = vld [vmem:[#allocation4 + $0x48] sm:$0xff]
        %v1210 = vld [vmem:[#allocation4 + $0x50] sm:$0xff]
        %v1211 = vld [vmem:[#allocation4 + $0x58] sm:$0xff]
        %v1212 = vld [vmem:[#allocation4 + $0x60] sm:$0xff]
        %v1213 = vld [vmem:[#allocation4 + $0x68] sm:$0xff]
        %v1214 = vld [vmem:[#allocation4 + $0x70] sm:$0xff]
        %v1215 = vld [vmem:[#allocation4 + $0x78] sm:$0xff]
        %v1216 = vld [vmem:[#allocation4 + $0x80] sm:$0xff]
        %v1217 = vld [vmem:[#allocation4 + $0x88] sm:$0xff]
        %v1218 = vld [vmem:[#allocation4 + $0x90] sm:$0xff]
        %v1219 = vld [vmem:[#allocation4 + $0x98] sm:$0xff]
        %v1220 = vld [vmem:[#allocation4 + $0xa0] sm:$0xff]
        %v1221 = vld [vmem:[#allocation4 + $0xa8] sm:$0xff]
        %v1222 = vld [vmem:[#allocation4 + $0xb0] sm:$0xff]
        %v1223 = vld [vmem:[#allocation4 + $0xb8] sm:$0xff]
        %v1224 = vld [vmem:[#allocation4 + $0xc0] sm:$0xff]
        %v1225 = vld [vmem:[#allocation4 + $0xc8] sm:$0xff]
        %v1226 = vld [vmem:[#allocation4 + $0xd0] sm:$0xff]
        %v1227 = vld [vmem:[#allocation4 + $0xd8] sm:$0xff]
        %v1228 = vld [vmem:[#allocation4 + $0xe0] sm:$0xff]
        %v1229 = vld [vmem:[#allocation4 + $0xe8] sm:$0xff]
        %v1230 = vld [vmem:[#allocation4 + $0xf0] sm:$0xff]
        %v1231 = vld [vmem:[#allocation4 + $0xf8] sm:$0xff]
        %v1232 = vld [vmem:[#allocation4 + $0x100] sm:$0xff]
        %v1233 = vld [vmem:[#allocation4 + $0x108] sm:$0xff]
        %v1234 = vld [vmem:[#allocation4 + $0x110] sm:$0xff]
        %v1235 = vld [vmem:[#allocation4 + $0x118] sm:$0xff]
        %v1236 = vld [vmem:[#allocation4 + $0x120] sm:$0xff]
        %v1237 = vld [vmem:[#allocation4 + $0x128] sm:$0xff]
        %v1238 = vld [vmem:[#allocation4 + $0x130] sm:$0xff]
        %v1239 = vld [vmem:[#allocation4 + $0x138] sm:$0xff]
        %v1240 = vld [vmem:[#allocation4 + $0x140] sm:$0xff]
        %v1241 = vld [vmem:[#allocation4 + $0x148] sm:$0xff]
        %v1242 = vld [vmem:[#allocation4 + $0x150] sm:$0xff]
        %v1243 = vld [vmem:[#allocation4 + $0x158] sm:$0xff]
        %v1244 = vld [vmem:[#allocation4 + $0x160] sm:$0xff]
        %v1245 = vld [vmem:[#allocation4 + $0x168] sm:$0xff]
        %v1246 = vld [vmem:[#allocation4 + $0x170] sm:$0xff]
        %v1247 = vld [vmem:[#allocation4 + $0x178] sm:$0xff]
        %v1248 = vld [vmem:[#allocation4 + $0x180] sm:$0xff]
        %v1249 = vld [vmem:[#allocation4 + $0x188] sm:$0xff]
        %v1250 = vld [vmem:[#allocation4 + $0x190] sm:$0xff]
        %v1251 = vld [vmem:[#allocation4 + $0x198] sm:$0xff]
        %v1252 = vld [vmem:[#allocation4 + $0x1a0] sm:$0xff]
        %v1253 = vld [vmem:[#allocation4 + $0x1a8] sm:$0xff]
        %v1254 = vld [vmem:[#allocation4 + $0x1b0] sm:$0xff]
        %v1255 = vld [vmem:[#allocation4 + $0x1b8] sm:$0xff]
        %v1256 = vld [vmem:[#allocation4 + $0x1c0] sm:$0xff]
        %v1257 = vld [vmem:[#allocation4 + $0x1c8] sm:$0xff]
        %v1258 = vld [vmem:[#allocation4 + $0x1d0] sm:$0xff]
        %v1259 = vld [vmem:[#allocation4 + $0x1d8] sm:$0xff]
        %v1260 = vld [vmem:[#allocation4 + $0x1e0] sm:$0xff]
        %v1261 = vld [vmem:[#allocation4 + $0x1e8] sm:$0xff]
        %v1262 = vld [vmem:[#allocation4 + $0x1f0] sm:$0xff]
        %v1263 = vld [vmem:[#allocation4 + $0x1f8] sm:$0xff]
        %v1264 = vld [vmem:[#allocation4 + $0x200] sm:$0xff]
        %v1265 = vld [vmem:[#allocation4 + $0x208] sm:$0xff]
        %v1266 = vld [vmem:[#allocation4 + $0x210] sm:$0xff]
        %v1267 = vld [vmem:[#allocation4 + $0x218] sm:$0xff]
        %v1268 = vld [vmem:[#allocation4 + $0x220] sm:$0xff]
        %v1269 = vld [vmem:[#allocation4 + $0x228] sm:$0xff]
        %v1270 = vld [vmem:[#allocation4 + $0x230] sm:$0xff]
        %v1271 = vld [vmem:[#allocation4 + $0x238] sm:$0xff]
        %v1272 = vld [vmem:[%s4] sm:$0x3f]
        %v1274 = vlaneseq
        %v1275 = vshrl.u32 %v1274, 7
        %v1276 = vsub.s32 0, %v1275
        %v1277 = vrot.slane %v1272, %v1276
        %v1278 = vlaneseq
        %v1279 = vshrl.u32 %v1278, 7
        %v1280 = vsub.s32 1, %v1279
        %v1281 = vrot.slane %v1272, %v1280
        %v1282 = vlaneseq
        %v1283 = vshrl.u32 %v1282, 7
        %v1284 = vsub.s32 2, %v1283
        %v1285 = vrot.slane %v1272, %v1284
        %v1286 = vlaneseq
        %v1287 = vshrl.u32 %v1286, 7
        %v1288 = vsub.s32 3, %v1287
        %v1289 = vrot.slane %v1272, %v1288
        %v1290 = vlaneseq
        %v1291 = vshrl.u32 %v1290, 7
        %v1292 = vsub.s32 4, %v1291
        %v1293 = vrot.slane %v1272, %v1292
        %v1294 = vlaneseq
        %v1295 = vshrl.u32 %v1294, 7
        %v1296 = vsub.s32 5, %v1295
        %v1297 = vrot.slane %v1272, %v1296
        %v1376 = vunpack.c.l.b16 %v1200
        %v1377 = vunpack.c.h.b16 %v1200
        %v1378 = vunpack.c.l.b16 %v1201
        %v1379 = vunpack.c.h.b16 %v1201
        %v1380 = vunpack.c.l.b16 %v1202
        %v1381 = vunpack.c.h.b16 %v1202
        %v1382 = vunpack.c.l.b16 %v1203
        %v1383 = vunpack.c.h.b16 %v1203
        %v1384 = vunpack.c.l.b16 %v1204
        %v1385 = vunpack.c.h.b16 %v1204
        %v1386 = vunpack.c.l.b16 %v1205
        %v1387 = vunpack.c.h.b16 %v1205
        %v1388 = vunpack.c.l.b16 %v1206
        %v1389 = vunpack.c.h.b16 %v1206
        %v1390 = vunpack.c.l.b16 %v1207
        %v1391 = vunpack.c.h.b16 %v1207
        %v1392 = vunpack.c.l.b16 %v1208
        %v1393 = vunpack.c.h.b16 %v1208
        %v1394 = vunpack.c.l.b16 %v1209
        %v1395 = vunpack.c.h.b16 %v1209
        %v1396 = vunpack.c.l.b16 %v1210
        %v1397 = vunpack.c.h.b16 %v1210
        %v1398 = vunpack.c.l.b16 %v1211
        %v1399 = vunpack.c.h.b16 %v1211
        %v1400 = vunpack.c.l.b16 %v1212
        %v1401 = vunpack.c.h.b16 %v1212
        %v1402 = vunpack.c.l.b16 %v1213
        %v1403 = vunpack.c.h.b16 %v1213
        %v1404 = vunpack.c.l.b16 %v1214
        %v1405 = vunpack.c.h.b16 %v1214
        %v1406 = vunpack.c.l.b16 %v1215
        %v1407 = vunpack.c.h.b16 %v1215
        %v1408 = vunpack.c.l.b16 %v1216
        %v1409 = vunpack.c.h.b16 %v1216
        %v1410 = vunpack.c.l.b16 %v1217
        %v1411 = vunpack.c.h.b16 %v1217
        %v1412 = vunpack.c.l.b16 %v1218
        %v1413 = vunpack.c.h.b16 %v1218
        %v1414 = vunpack.c.l.b16 %v1219
        %v1415 = vunpack.c.h.b16 %v1219
        %v1416 = vunpack.c.l.b16 %v1220
        %v1417 = vunpack.c.h.b16 %v1220
        %v1418 = vunpack.c.l.b16 %v1221
        %v1419 = vunpack.c.h.b16 %v1221
        %v1420 = vunpack.c.l.b16 %v1222
        %v1421 = vunpack.c.h.b16 %v1222
        %v1422 = vunpack.c.l.b16 %v1223
        %v1423 = vunpack.c.h.b16 %v1223
        %v1424 = vunpack.c.l.b16 %v1224
        %v1425 = vunpack.c.h.b16 %v1224
        %v1426 = vunpack.c.l.b16 %v1225
        %v1427 = vunpack.c.h.b16 %v1225
        %v1428 = vunpack.c.l.b16 %v1226
        %v1429 = vunpack.c.h.b16 %v1226
        %v1430 = vunpack.c.l.b16 %v1227
        %v1431 = vunpack.c.h.b16 %v1227
        %v1432 = vunpack.c.l.b16 %v1228
        %v1433 = vunpack.c.h.b16 %v1228
        %v1434 = vunpack.c.l.b16 %v1229
        %v1435 = vunpack.c.h.b16 %v1229
        %v1436 = vunpack.c.l.b16 %v1230
        %v1437 = vunpack.c.h.b16 %v1230
        %v1438 = vunpack.c.l.b16 %v1231
        %v1439 = vunpack.c.h.b16 %v1231
        %v1440 = vunpack.c.l.b16 %v1232
        %v1441 = vunpack.c.h.b16 %v1232
        %v1442 = vunpack.c.l.b16 %v1233
        %v1443 = vunpack.c.h.b16 %v1233
        %v1444 = vunpack.c.l.b16 %v1234
        %v1445 = vunpack.c.h.b16 %v1234
        %v1446 = vunpack.c.l.b16 %v1235
        %v1447 = vunpack.c.h.b16 %v1235
        %v1448 = vunpack.c.l.b16 %v1236
        %v1449 = vunpack.c.h.b16 %v1236
        %v1450 = vunpack.c.l.b16 %v1237
        %v1451 = vunpack.c.h.b16 %v1237
        %v1452 = vunpack.c.l.b16 %v1238
        %v1453 = vunpack.c.h.b16 %v1238
        %v1454 = vunpack.c.l.b16 %v1239
        %v1455 = vunpack.c.h.b16 %v1239
        %v1456 = vunpack.c.l.b16 %v1240
        %v1457 = vunpack.c.h.b16 %v1240
        %v1458 = vunpack.c.l.b16 %v1241
        %v1459 = vunpack.c.h.b16 %v1241
        %v1460 = vunpack.c.l.b16 %v1242
        %v1461 = vunpack.c.h.b16 %v1242
        %v1462 = vunpack.c.l.b16 %v1243
        %v1463 = vunpack.c.h.b16 %v1243
        %v1464 = vunpack.c.l.b16 %v1244
        %v1465 = vunpack.c.h.b16 %v1244
        %v1466 = vunpack.c.l.b16 %v1245
        %v1467 = vunpack.c.h.b16 %v1245
        %v1468 = vunpack.c.l.b16 %v1246
        %v1469 = vunpack.c.h.b16 %v1246
        %v1470 = vunpack.c.l.b16 %v1247
        %v1471 = vunpack.c.h.b16 %v1247
        %v1472 = vunpack.c.l.b16 %v1248
        %v1473 = vunpack.c.h.b16 %v1248
        %v1474 = vunpack.c.l.b16 %v1249
        %v1475 = vunpack.c.h.b16 %v1249
        %v1476 = vunpack.c.l.b16 %v1250
        %v1477 = vunpack.c.h.b16 %v1250
        %v1478 = vunpack.c.l.b16 %v1251
        %v1479 = vunpack.c.h.b16 %v1251
        %v1480 = vunpack.c.l.b16 %v1252
        %v1481 = vunpack.c.h.b16 %v1252
        %v1482 = vunpack.c.l.b16 %v1253
        %v1483 = vunpack.c.h.b16 %v1253
        %v1484 = vunpack.c.l.b16 %v1254
        %v1485 = vunpack.c.h.b16 %v1254
        %v1486 = vunpack.c.l.b16 %v1255
        %v1487 = vunpack.c.h.b16 %v1255
        %v1488 = vunpack.c.l.b16 %v1256
        %v1489 = vunpack.c.h.b16 %v1256
        %v1490 = vunpack.c.l.b16 %v1257
        %v1491 = vunpack.c.h.b16 %v1257
        %v1492 = vunpack.c.l.b16 %v1258
        %v1493 = vunpack.c.h.b16 %v1258
        %v1494 = vunpack.c.l.b16 %v1259
        %v1495 = vunpack.c.h.b16 %v1259
        %v1496 = vunpack.c.l.b16 %v1260
        %v1497 = vunpack.c.h.b16 %v1260
        %v1498 = vunpack.c.l.b16 %v1261
        %v1499 = vunpack.c.h.b16 %v1261
        %v1500 = vunpack.c.l.b16 %v1262
        %v1501 = vunpack.c.h.b16 %v1262
        %v1502 = vunpack.c.l.b16 %v1263
        %v1503 = vunpack.c.h.b16 %v1263
        %v1504 = vunpack.c.l.b16 %v1264
        %v1505 = vunpack.c.h.b16 %v1264
        %v1506 = vunpack.c.l.b16 %v1265
        %v1507 = vunpack.c.h.b16 %v1265
        %v1508 = vunpack.c.l.b16 %v1266
        %v1509 = vunpack.c.h.b16 %v1266
        %v1510 = vunpack.c.l.b16 %v1267
        %v1511 = vunpack.c.h.b16 %v1267
        %v1512 = vunpack.c.l.b16 %v1268
        %v1513 = vunpack.c.h.b16 %v1268
        %v1514 = vunpack.c.l.b16 %v1269
        %v1515 = vunpack.c.h.b16 %v1269
        %v1516 = vunpack.c.l.b16 %v1270
        %v1517 = vunpack.c.h.b16 %v1270
        %v1518 = vunpack.c.l.b16 %v1271
        %v1519 = vunpack.c.h.b16 %v1271
        %v1520 = vpack.c.b16 %v1382, %v1376
        %v1521 = vpack.c.b16 %v1383, %v1377
        %v1522 = vpack.c.b16 %v1384, %v1378
        %v1523 = vpack.c.b16 %v1385, %v1379
        %v1524 = vpack.c.b16 %v1386, %v1380
        %v1525 = vpack.c.b16 %v1387, %v1381
        %v1526 = vpack.c.b16 %v1394, %v1388
        %v1527 = vpack.c.b16 %v1395, %v1389
        %v1528 = vpack.c.b16 %v1396, %v1390
        %v1529 = vpack.c.b16 %v1397, %v1391
        %v1530 = vpack.c.b16 %v1398, %v1392
        %v1531 = vpack.c.b16 %v1399, %v1393
        %v1532 = vpack.c.b16 %v1406, %v1400
        %v1533 = vpack.c.b16 %v1407, %v1401
        %v1534 = vpack.c.b16 %v1408, %v1402
        %v1535 = vpack.c.b16 %v1409, %v1403
        %v1536 = vpack.c.b16 %v1410, %v1404
        %v1537 = vpack.c.b16 %v1411, %v1405
        %v1538 = vpack.c.b16 %v1418, %v1412
        %v1539 = vpack.c.b16 %v1419, %v1413
        %v1540 = vpack.c.b16 %v1420, %v1414
        %v1541 = vpack.c.b16 %v1421, %v1415
        %v1542 = vpack.c.b16 %v1422, %v1416
        %v1543 = vpack.c.b16 %v1423, %v1417
        %v1544 = vpack.c.b16 %v1430, %v1424
        %v1545 = vpack.c.b16 %v1431, %v1425
        %v1546 = vpack.c.b16 %v1432, %v1426
        %v1547 = vpack.c.b16 %v1433, %v1427
        %v1548 = vpack.c.b16 %v1434, %v1428
        %v1549 = vpack.c.b16 %v1435, %v1429
        %v1550 = vpack.c.b16 %v1442, %v1436
        %v1551 = vpack.c.b16 %v1443, %v1437
        %v1552 = vpack.c.b16 %v1444, %v1438
        %v1553 = vpack.c.b16 %v1445, %v1439
        %v1554 = vpack.c.b16 %v1446, %v1440
        %v1555 = vpack.c.b16 %v1447, %v1441
        %v1556 = vpack.c.b16 %v1454, %v1448
        %v1557 = vpack.c.b16 %v1455, %v1449
        %v1558 = vpack.c.b16 %v1456, %v1450
        %v1559 = vpack.c.b16 %v1457, %v1451
        %v1560 = vpack.c.b16 %v1458, %v1452
        %v1561 = vpack.c.b16 %v1459, %v1453
        %v1562 = vpack.c.b16 %v1466, %v1460
        %v1563 = vpack.c.b16 %v1467, %v1461
        %v1564 = vpack.c.b16 %v1468, %v1462
        %v1565 = vpack.c.b16 %v1469, %v1463
        %v1566 = vpack.c.b16 %v1470, %v1464
        %v1567 = vpack.c.b16 %v1471, %v1465
        %v1568 = vpack.c.b16 %v1478, %v1472
        %v1569 = vpack.c.b16 %v1479, %v1473
        %v1570 = vpack.c.b16 %v1480, %v1474
        %v1571 = vpack.c.b16 %v1481, %v1475
        %v1572 = vpack.c.b16 %v1482, %v1476
        %v1573 = vpack.c.b16 %v1483, %v1477
        %v1574 = vpack.c.b16 %v1490, %v1484
        %v1575 = vpack.c.b16 %v1491, %v1485
        %v1576 = vpack.c.b16 %v1492, %v1486
        %v1577 = vpack.c.b16 %v1493, %v1487
        %v1578 = vpack.c.b16 %v1494, %v1488
        %v1579 = vpack.c.b16 %v1495, %v1489
        %v1580 = vpack.c.b16 %v1502, %v1496
        %v1581 = vpack.c.b16 %v1503, %v1497
        %v1582 = vpack.c.b16 %v1504, %v1498
        %v1583 = vpack.c.b16 %v1505, %v1499
        %v1584 = vpack.c.b16 %v1506, %v1500
        %v1585 = vpack.c.b16 %v1507, %v1501
        %v1586 = vpack.c.b16 %v1514, %v1508
        %v1587 = vpack.c.b16 %v1515, %v1509
        %v1588 = vpack.c.b16 %v1516, %v1510
        %v1589 = vpack.c.b16 %v1517, %v1511
        %v1590 = vpack.c.b16 %v1518, %v1512
        %v1591 = vpack.c.b16 %v1519, %v1513
        %vm1664 = vcmask 523264
        %v1666 = vsel %vm1664, %v1199, 0
        %1668 = vmatprep.subr.bf16.mxu0 %v1521
        %1669 = vmatpush1.bf16.msra.mxu0 %v1520
        %1670 = vmatprep.subr.bf16.mxu0 %v1527
        %1671 = vmatpush1.bf16.msra.mxu0 %v1526
        %1672 = vmatprep.subr.bf16.mxu0 %v1533
        %1673 = vmatpush1.bf16.msra.mxu0 %v1532
        %1674 = vmatprep.subr.bf16.mxu0 %v1539
        %1675 = vmatpush1.bf16.msra.mxu0 %v1538
        %1676 = vmatprep.subr.bf16.mxu0 %v1545
        %1677 = vmatpush1.bf16.msra.mxu0 %v1544
        %1678 = vmatprep.subr.bf16.mxu0 %v1551
        %1679 = vmatpush1.bf16.msra.mxu0 %v1550
        %1680 = vmatprep.subr.bf16.mxu0 %v1557
        %1681 = vmatpush1.bf16.msra.mxu0 %v1556
        %1682 = vmatprep.subr.bf16.mxu0 %v1563
        %1683 = vmatpush1.bf16.msra.mxu0 %v1562
        %1684 = vmatprep.subr.bf16.mxu0 %v1569
        %1685 = vmatpush1.bf16.msra.mxu0 %v1568
        %1686 = vmatprep.subr.bf16.mxu0 %v1575
        %1687 = vmatpush1.bf16.msra.mxu0 %v1574
        %1688 = vmatprep.subr.bf16.mxu0 %v1581
        %1689 = vmatpush1.bf16.msra.mxu0 %v1580
        %1690 = vmatprep.subr.bf16.mxu0 %v1587
        %1691 = vmatpush1.bf16.msra.mxu0 %v1586
        %1692 = vmatprep.subr.bf16.mxu0 0
        %1693 = vmatpush1.bf16.msra.mxu0 0
        %1694 = vmatprep.subr.bf16.mxu0 0
        %1695 = vmatpush1.bf16.msra.mxu0 0
        %1696 = vmatprep.subr.bf16.mxu0 0
        %1697 = vmatpush1.bf16.msra.mxu0 0
        %1698 = vmatprep.subr.bf16.mxu0 0
        %1699 = vmatpush1.bf16.msra.mxu0 0
        %1700 = vmatprep.mubr.bf16.mxu0 %v1666
        %1701 = vmatmul.mubr.bf16.gmra.mrb[0].mxu0 %v1198
        %v1702 = vpop.f32.mrb[0].mxu0
        %v1703 = vadd.f32 %v1277, %v1702
        %v1704 = vpop.f32.mrb[0].mxu0
        %v1705 = vadd.f32 %v1281, %v1704
        %v1706 = vpop.f32.mrb[0].mxu0
        %v1707 = vpop.f32.mrb[0].mxu0
        %1708 = vdwg.mxu0
        %1709 = vmatprep.subr.bf16.mxu0 %v1523
        %1710 = vmatpush1.bf16.msra.mxu0 %v1522
        %1711 = vmatprep.subr.bf16.mxu0 %v1529
        %1712 = vmatpush1.bf16.msra.mxu0 %v1528
        %1713 = vmatprep.subr.bf16.mxu0 %v1535
        %1714 = vmatpush1.bf16.msra.mxu0 %v1534
        %1715 = vmatprep.subr.bf16.mxu0 %v1541
        %1716 = vmatpush1.bf16.msra.mxu0 %v1540
        %1717 = vmatprep.subr.bf16.mxu0 %v1547
        %1718 = vmatpush1.bf16.msra.mxu0 %v1546
        %1719 = vmatprep.subr.bf16.mxu0 %v1553
        %1720 = vmatpush1.bf16.msra.mxu0 %v1552
        %1721 = vmatprep.subr.bf16.mxu0 %v1559
        %1722 = vmatpush1.bf16.msra.mxu0 %v1558
        %1723 = vmatprep.subr.bf16.mxu0 %v1565
        %1724 = vmatpush1.bf16.msra.mxu0 %v1564
        %1725 = vmatprep.subr.bf16.mxu0 %v1571
        %1726 = vmatpush1.bf16.msra.mxu0 %v1570
        %1727 = vmatprep.subr.bf16.mxu0 %v1577
        %1728 = vmatpush1.bf16.msra.mxu0 %v1576
        %1729 = vmatprep.subr.bf16.mxu0 %v1583
        %1730 = vmatpush1.bf16.msra.mxu0 %v1582
        %1731 = vmatprep.subr.bf16.mxu0 %v1589
        %1732 = vmatpush1.bf16.msra.mxu0 %v1588
        %1733 = vmatprep.subr.bf16.mxu0 0
        %1734 = vmatpush1.bf16.msra.mxu0 0
        %1735 = vmatprep.subr.bf16.mxu0 0
        %1736 = vmatpush1.bf16.msra.mxu0 0
        %1737 = vmatprep.subr.bf16.mxu0 0
        %1738 = vmatpush1.bf16.msra.mxu0 0
        %1739 = vmatprep.subr.bf16.mxu0 0
        %1740 = vmatpush1.bf16.msra.mxu0 0
        %1741 = vmatprep.mubr.bf16.mxu0 %v1666
        %1742 = vmatmul.mubr.bf16.gmra.mrb[0].mxu0 %v1198
        %v1743 = vpop.f32.mrb[0].mxu0
        %v1744 = vadd.f32 %v1285, %v1743
        %v1745 = vpop.f32.mrb[0].mxu0
        %v1746 = vadd.f32 %v1289, %v1745
        %v1747 = vpop.f32.mrb[0].mxu0
        %v1748 = vpop.f32.mrb[0].mxu0
        %1749 = vdwg.mxu0
        %1750 = vmatprep.subr.bf16.mxu0 %v1525
        %1751 = vmatpush1.bf16.msra.mxu0 %v1524
        %1752 = vmatprep.subr.bf16.mxu0 %v1531
        %1753 = vmatpush1.bf16.msra.mxu0 %v1530
        %1754 = vmatprep.subr.bf16.mxu0 %v1537
        %1755 = vmatpush1.bf16.msra.mxu0 %v1536
        %1756 = vmatprep.subr.bf16.mxu0 %v1543
        %1757 = vmatpush1.bf16.msra.mxu0 %v1542
        %1758 = vmatprep.subr.bf16.mxu0 %v1549
        %1759 = vmatpush1.bf16.msra.mxu0 %v1548
        %1760 = vmatprep.subr.bf16.mxu0 %v1555
        %1761 = vmatpush1.bf16.msra.mxu0 %v1554
        %1762 = vmatprep.subr.bf16.mxu0 %v1561
        %1763 = vmatpush1.bf16.msra.mxu0 %v1560
        %1764 = vmatprep.subr.bf16.mxu0 %v1567
        %1765 = vmatpush1.bf16.msra.mxu0 %v1566
        %1766 = vmatprep.subr.bf16.mxu0 %v1573
        %1767 = vmatpush1.bf16.msra.mxu0 %v1572
        %1768 = vmatprep.subr.bf16.mxu0 %v1579
        %1769 = vmatpush1.bf16.msra.mxu0 %v1578
        %1770 = vmatprep.subr.bf16.mxu0 %v1585
        %1771 = vmatpush1.bf16.msra.mxu0 %v1584
        %1772 = vmatprep.subr.bf16.mxu0 %v1591
        %1773 = vmatpush1.bf16.msra.mxu0 %v1590
        %1774 = vmatprep.subr.bf16.mxu0 0
        %1775 = vmatpush1.bf16.msra.mxu0 0
        %1776 = vmatprep.subr.bf16.mxu0 0
        %1777 = vmatpush1.bf16.msra.mxu0 0
        %1778 = vmatprep.subr.bf16.mxu0 0
        %1779 = vmatpush1.bf16.msra.mxu0 0
        %1780 = vmatprep.subr.bf16.mxu0 0
        %1781 = vmatpush1.bf16.msra.mxu0 0
        %1782 = vmatprep.mubr.bf16.mxu0 %v1666
        %1783 = vmatmul.mubr.bf16.gmra.mrb[0].mxu0 %v1198
        %v1784 = vpop.f32.mrb[0].mxu0
        %v1785 = vadd.f32 %v1293, %v1784
        %v1786 = vpop.f32.mrb[0].mxu0
        %v1787 = vadd.f32 %v1297, %v1786
        %v1788 = vpop.f32.mrb[0].mxu0
        %v1789 = vpop.f32.mrb[0].mxu0
        %1790 = vdwg.mxu0
        %v1791 = vmax.f32 %v1703, 0.0
        %v1792 = vmax.f32 %v1705, 0.0
        %v1793 = vmax.f32 %v1744, 0.0
        %v1794 = vmax.f32 %v1746, 0.0
        %v1795 = vmax.f32 %v1785, 0.0
        %v1796 = vmax.f32 %v1787, 0.0
        %v1797 = vmax.f32 %v1791, %v1794
        %v1798 = vmax.f32 %v1792, %v1795
        %v1799 = vmax.f32 %v1793, %v1796
        %v1800 = vpack.c.bf16 %v1797, %v1797
        %v1801 = vpack.c.bf16 %v1798, %v1798
        %v1802 = vpack.c.bf16 %v1799, %v1799
        %v1803 = vld [vmem:[%s5] sm:$0xf]
        %v1804 = vld [vmem:[%s5 + $0x4] sm:$0xf]
        %v1805 = vld [vmem:[%s5 + $0x8] sm:$0xf]
        %v1806 = vld [vmem:[%s5 + $0xc] sm:$0xf]
        %v1807 = vld [vmem:[%s5 + $0x10] sm:$0xf]
        %v1808 = vld [vmem:[%s5 + $0x14] sm:$0xf]
        %v1809 = vld [vmem:[%s5 + $0x18] sm:$0xf]
        %v1810 = vld [vmem:[%s5 + $0x1c] sm:$0xf]
        %v1811 = vld [vmem:[%s5 + $0x20] sm:$0xf]
        %v1812 = vld [vmem:[%s5 + $0x24] sm:$0xf]
        %v1813 = vld [vmem:[%s5 + $0x28] sm:$0xf]
        %v1814 = vld [vmem:[%s5 + $0x2c] sm:$0xf]
        %v1815 = vld [vmem:[%s5 + $0x30] sm:$0xf]
        %v1816 = vld [vmem:[%s5 + $0x34] sm:$0xf]
        %v1817 = vld [vmem:[%s5 + $0x38] sm:$0xf]
        %v1818 = vld [vmem:[%s5 + $0x3c] sm:$0xf]
        %v1819 = vld [vmem:[%s5 + $0x40] sm:$0xf]
        %v1820 = vld [vmem:[%s5 + $0x44] sm:$0xf]
        %v1821 = vld [vmem:[%s5 + $0x48] sm:$0xf]
        %v1822 = vld [vmem:[%s5 + $0x4c] sm:$0xf]
        %v1823 = vld [vmem:[%s5 + $0x50] sm:$0xf]
        %v1824 = vld [vmem:[%s5 + $0x54] sm:$0xf]
        %v1825 = vld [vmem:[%s5 + $0x58] sm:$0xf]
        %v1826 = vld [vmem:[%s5 + $0x5c] sm:$0xf]
        %v1827 = vld [vmem:[%s5 + $0x60] sm:$0xf]
        %v1828 = vld [vmem:[%s5 + $0x64] sm:$0xf]
        %v1829 = vld [vmem:[%s5 + $0x68] sm:$0xf]
        %v1830 = vld [vmem:[%s5 + $0x6c] sm:$0xf]
        %v1831 = vld [vmem:[%s5 + $0x70] sm:$0xf]
        %v1832 = vld [vmem:[%s5 + $0x74] sm:$0xf]
        %v1833 = vld [vmem:[%s5 + $0x78] sm:$0xf]
        %v1834 = vld [vmem:[%s5 + $0x7c] sm:$0xf]
        %v1835 = vld [vmem:[%s5 + $0x80] sm:$0xf]
        %v1836 = vld [vmem:[%s5 + $0x84] sm:$0xf]
        %v1837 = vld [vmem:[%s5 + $0x88] sm:$0xf]
        %v1838 = vld [vmem:[%s5 + $0x8c] sm:$0xf]
        %v1839 = vld [vmem:[%s5 + $0x90] sm:$0xf]
        %v1840 = vld [vmem:[%s5 + $0x94] sm:$0xf]
        %v1841 = vld [vmem:[%s5 + $0x98] sm:$0xf]
        %v1842 = vld [vmem:[%s5 + $0x9c] sm:$0xf]
        %v1843 = vld [vmem:[%s5 + $0xa0] sm:$0xf]
        %v1844 = vld [vmem:[%s5 + $0xa4] sm:$0xf]
        %v1845 = vld [vmem:[%s5 + $0xa8] sm:$0xf]
        %v1846 = vld [vmem:[%s5 + $0xac] sm:$0xf]
        %v1847 = vld [vmem:[%s6] sm:$0x1]
        %v1849 = vlaneseq
        %v1850 = vshrl.u32 %v1849, 7
        %v1851 = vsub.s32 0, %v1850
        %v1852 = vrot.slane %v1847, %v1851
        %v1898 = vunpack.c.l.b16 %v1803
        %v1899 = vunpack.c.l.b16 %v1804
        %v1900 = vunpack.c.l.b16 %v1805
        %v1901 = vunpack.c.l.b16 %v1806
        %v1902 = vunpack.c.l.b16 %v1807
        %v1903 = vunpack.c.l.b16 %v1808
        %v1904 = vunpack.c.l.b16 %v1809
        %v1905 = vunpack.c.l.b16 %v1810
        %v1906 = vunpack.c.l.b16 %v1811
        %v1907 = vunpack.c.l.b16 %v1812
        %v1908 = vunpack.c.l.b16 %v1813
        %v1909 = vunpack.c.l.b16 %v1814
        %v1910 = vunpack.c.l.b16 %v1815
        %v1911 = vunpack.c.l.b16 %v1816
        %v1912 = vunpack.c.l.b16 %v1817
        %v1913 = vunpack.c.l.b16 %v1818
        %v1914 = vunpack.c.l.b16 %v1819
        %v1915 = vunpack.c.l.b16 %v1820
        %v1916 = vunpack.c.l.b16 %v1821
        %v1917 = vunpack.c.l.b16 %v1822
        %v1918 = vunpack.c.l.b16 %v1823
        %v1919 = vunpack.c.l.b16 %v1824
        %v1920 = vunpack.c.l.b16 %v1825
        %v1921 = vunpack.c.l.b16 %v1826
        %v1922 = vunpack.c.l.b16 %v1827
        %v1923 = vunpack.c.l.b16 %v1828
        %v1924 = vunpack.c.l.b16 %v1829
        %v1925 = vunpack.c.l.b16 %v1830
        %v1926 = vunpack.c.l.b16 %v1831
        %v1927 = vunpack.c.l.b16 %v1832
        %v1928 = vunpack.c.l.b16 %v1833
        %v1929 = vunpack.c.l.b16 %v1834
        %v1930 = vunpack.c.l.b16 %v1835
        %v1931 = vunpack.c.l.b16 %v1836
        %v1932 = vunpack.c.l.b16 %v1837
        %v1933 = vunpack.c.l.b16 %v1838
        %v1934 = vunpack.c.l.b16 %v1839
        %v1935 = vunpack.c.l.b16 %v1840
        %v1936 = vunpack.c.l.b16 %v1841
        %v1937 = vunpack.c.l.b16 %v1842
        %v1938 = vunpack.c.l.b16 %v1843
        %v1939 = vunpack.c.l.b16 %v1844
        %v1940 = vunpack.c.l.b16 %v1845
        %v1941 = vunpack.c.l.b16 %v1846
        %v1942 = vpack.c.b16 %v1899, %v1898
        %v1943 = vpack.c.b16 %v1901, %v1900
        %v1944 = vpack.c.b16 %v1903, %v1902
        %v1945 = vpack.c.b16 %v1905, %v1904
        %v1946 = vpack.c.b16 %v1907, %v1906
        %v1947 = vpack.c.b16 %v1909, %v1908
        %v1948 = vpack.c.b16 %v1911, %v1910
        %v1949 = vpack.c.b16 %v1913, %v1912
        %v1950 = vpack.c.b16 %v1915, %v1914
        %v1951 = vpack.c.b16 %v1917, %v1916
        %v1952 = vpack.c.b16 %v1919, %v1918
        %v1953 = vpack.c.b16 %v1921, %v1920
        %v1954 = vpack.c.b16 %v1923, %v1922
        %v1955 = vpack.c.b16 %v1925, %v1924
        %v1956 = vpack.c.b16 %v1927, %v1926
        %v1957 = vpack.c.b16 %v1929, %v1928
        %v1958 = vpack.c.b16 %v1931, %v1930
        %v1959 = vpack.c.b16 %v1933, %v1932
        %v1960 = vpack.c.b16 %v1935, %v1934
        %v1961 = vpack.c.b16 %v1937, %v1936
        %v1962 = vpack.c.b16 %v1939, %v1938
        %v1963 = vpack.c.b16 %v1941, %v1940
        %vm1986 = vcmask 785408
        %v1988 = vsel %vm1986, %v1802, 0
        %1990 = vmatprep.subr.bf16.mxu0 0
        %1991 = vmatpush1.bf16.msra.mxu0 %v1942
        %1992 = vmatprep.subr.bf16.mxu0 0
        %1993 = vmatpush1.bf16.msra.mxu0 %v1943
        %1994 = vmatprep.subr.bf16.mxu0 0
        %1995 = vmatpush1.bf16.msra.mxu0 %v1944
        %1996 = vmatprep.subr.bf16.mxu0 0
        %1997 = vmatpush1.bf16.msra.mxu0 %v1945
        %1998 = vmatprep.subr.bf16.mxu0 0
        %1999 = vmatpush1.bf16.msra.mxu0 %v1946
        %2000 = vmatprep.subr.bf16.mxu0 0
        %2001 = vmatpush1.bf16.msra.mxu0 %v1947
        %2002 = vmatprep.subr.bf16.mxu0 0
        %2003 = vmatpush1.bf16.msra.mxu0 %v1948
        %2004 = vmatprep.subr.bf16.mxu0 0
        %2005 = vmatpush1.bf16.msra.mxu0 %v1949
        %2006 = vmatprep.subr.bf16.mxu0 0
        %2007 = vmatpush1.bf16.msra.mxu0 %v1950
        %2008 = vmatprep.subr.bf16.mxu0 0
        %2009 = vmatpush1.bf16.msra.mxu0 %v1951
        %2010 = vmatprep.subr.bf16.mxu0 0
        %2011 = vmatpush1.bf16.msra.mxu0 %v1952
        %2012 = vmatprep.subr.bf16.mxu0 0
        %2013 = vmatpush1.bf16.msra.mxu0 %v1953
        %2014 = vmatprep.subr.bf16.mxu0 0
        %2015 = vmatpush1.bf16.msra.mxu0 %v1954
        %2016 = vmatprep.subr.bf16.mxu0 0
        %2017 = vmatpush1.bf16.msra.mxu0 %v1955
        %2018 = vmatprep.subr.bf16.mxu0 0
        %2019 = vmatpush1.bf16.msra.mxu0 %v1956
        %2020 = vmatprep.subr.bf16.mxu0 0
        %2021 = vmatpush1.bf16.msra.mxu0 %v1957
        %2022 = vmatprep.mubr.bf16.mxu0 %v1801
        %2023 = vmatmul.mubr.bf16.gmra.mrb[0].mxu0 %v1800
        %v2024 = vpop.f32.mrb[0].mxu0
        %v2025 = vadd.f32 %v1852, %v2024
        %v2026 = vpop.f32.mrb[0].mxu0
        %v2027 = vpop.f32.mrb[0].mxu0
        %v2028 = vpop.f32.mrb[0].mxu0
        %2029 = vdwg.mxu0
        %2030 = vmatprep.subr.bf16.mxu0 0
        %2031 = vmatpush1.bf16.msra.mxu0 %v1958
        %2032 = vmatprep.subr.bf16.mxu0 0
        %2033 = vmatpush1.bf16.msra.mxu0 %v1959
        %2034 = vmatprep.subr.bf16.mxu0 0
        %2035 = vmatpush1.bf16.msra.mxu0 %v1960
        %2036 = vmatprep.subr.bf16.mxu0 0
        %2037 = vmatpush1.bf16.msra.mxu0 %v1961
        %2038 = vmatprep.subr.bf16.mxu0 0
        %2039 = vmatpush1.bf16.msra.mxu0 %v1962
        %2040 = vmatprep.subr.bf16.mxu0 0
        %2041 = vmatpush1.bf16.msra.mxu0 %v1963
        %2042 = vmatprep.subr.bf16.mxu0 0
        %2043 = vmatpush1.bf16.msra.mxu0 0
        %2044 = vmatprep.subr.bf16.mxu0 0
        %2045 = vmatpush1.bf16.msra.mxu0 0
        %2046 = vmatprep.subr.bf16.mxu0 0
        %2047 = vmatpush1.bf16.msra.mxu0 0
        %2048 = vmatprep.subr.bf16.mxu0 0
        %2049 = vmatpush1.bf16.msra.mxu0 0
        %2050 = vmatprep.subr.bf16.mxu0 0
        %2051 = vmatpush1.bf16.msra.mxu0 0
        %2052 = vmatprep.subr.bf16.mxu0 0
        %2053 = vmatpush1.bf16.msra.mxu0 0
        %2054 = vmatprep.subr.bf16.mxu0 0
        %2055 = vmatpush1.bf16.msra.mxu0 0
        %2056 = vmatprep.subr.bf16.mxu0 0
        %2057 = vmatpush1.bf16.msra.mxu0 0
        %2058 = vmatprep.subr.bf16.mxu0 0
        %2059 = vmatpush1.bf16.msra.mxu0 0
        %2060 = vmatprep.subr.bf16.mxu0 0
        %2061 = vmatpush1.bf16.msra.mxu0 0
        %2062 = vmatprep.mubr.bf16.mxu0 0
        %2063 = vmatmul.mubr.bf16.gmra.mrb[0].mxu0 %v1988
        %v2064 = vpop.f32.mrb[0].mxu0
        %v2065 = vadd.f32 %v2025, %v2064
        %v2066 = vpop.f32.mrb[0].mxu0
        %v2067 = vpop.f32.mrb[0].mxu0
        %v2068 = vpop.f32.mrb[0].mxu0
        %2069 = vdwg.mxu0
        %v2070 = vmax.f32 %v2065, 0.0
        %v2071 = vpack.c.bf16 %v2070, %v2070
        %v2072 = vld [vmem:[%s7] sm:$0xf]
        %v2073 = vld [vmem:[%s7 + $0x4] sm:$0xf]
        %v2074 = vld [vmem:[%s7 + $0x8] sm:$0xf]
        %v2075 = vld [vmem:[%s7 + $0xc] sm:$0xf]
        %v2076 = vld [vmem:[%s7 + $0x10] sm:$0xf]
        %v2077 = vld [vmem:[%s7 + $0x14] sm:$0xf]
        %v2078 = vld [vmem:[%s7 + $0x18] sm:$0xf]
        %v2079 = vld [vmem:[%s7 + $0x1c] sm:$0xf]
        %v2080 = vld [vmem:[%s8] sm:$0x1]
        %v2082 = vlaneseq
        %v2083 = vshrl.u32 %v2082, 7
        %v2084 = vsub.s32 0, %v2083
        %v2085 = vrot.slane %v2080, %v2084
        %v2095 = vunpack.c.l.b16 %v2072
        %v2096 = vunpack.c.l.b16 %v2073
        %v2097 = vunpack.c.l.b16 %v2074
        %v2098 = vunpack.c.l.b16 %v2075
        %v2099 = vunpack.c.l.b16 %v2076
        %v2100 = vunpack.c.l.b16 %v2077
        %v2101 = vunpack.c.l.b16 %v2078
        %v2102 = vunpack.c.l.b16 %v2079
        %v2103 = vpack.c.b16 %v2096, %v2095
        %v2104 = vpack.c.b16 %v2098, %v2097
        %v2105 = vpack.c.b16 %v2100, %v2099
        %v2106 = vpack.c.b16 %v2102, %v2101
        %v2112 = vsel %vm1664, %v2071, 0
        %2114 = vmatprep.subr.bf16.mxu0 0
        %2115 = vmatpush1.bf16.msra.mxu0 %v2103
        %2116 = vmatprep.subr.bf16.mxu0 0
        %2117 = vmatpush1.bf16.msra.mxu0 %v2104
        %2118 = vmatprep.subr.bf16.mxu0 0
        %2119 = vmatpush1.bf16.msra.mxu0 %v2105
        %2120 = vmatprep.subr.bf16.mxu0 0
        %2121 = vmatpush1.bf16.msra.mxu0 %v2106
        %2122 = vmatprep.subr.bf16.mxu0 0
        %2123 = vmatpush1.bf16.msra.mxu0 0
        %2124 = vmatprep.subr.bf16.mxu0 0
        %2125 = vmatpush1.bf16.msra.mxu0 0
        %2126 = vmatprep.subr.bf16.mxu0 0
        %2127 = vmatpush1.bf16.msra.mxu0 0
        %2128 = vmatprep.subr.bf16.mxu0 0
        %2129 = vmatpush1.bf16.msra.mxu0 0
        %2130 = vmatprep.subr.bf16.mxu0 0
        %2131 = vmatpush1.bf16.msra.mxu0 0
        %2132 = vmatprep.subr.bf16.mxu0 0
        %2133 = vmatpush1.bf16.msra.mxu0 0
        %2134 = vmatprep.subr.bf16.mxu0 0
        %2135 = vmatpush1.bf16.msra.mxu0 0
        %2136 = vmatprep.subr.bf16.mxu0 0
        %2137 = vmatpush1.bf16.msra.mxu0 0
        %2138 = vmatprep.subr.bf16.mxu0 0
        %2139 = vmatpush1.bf16.msra.mxu0 0
        %2140 = vmatprep.subr.bf16.mxu0 0
        %2141 = vmatpush1.bf16.msra.mxu0 0
        %2142 = vmatprep.subr.bf16.mxu0 0
        %2143 = vmatpush1.bf16.msra.mxu0 0
        %2144 = vmatprep.subr.bf16.mxu0 0
        %2145 = vmatpush1.bf16.msra.mxu0 0
        %2146 = vmatprep.mubr.bf16.mxu0 0
        %2147 = vmatmul.mubr.bf16.gmra.mrb[0].mxu0 %v2112
        %v2148 = vpop.f32.mrb[0].mxu0
        %v2149 = vadd.f32 %v2085, %v2148
        %v2150 = vpop.f32.mrb[0].mxu0
        %v2151 = vpop.f32.mrb[0].mxu0
        %v2152 = vpop.f32.mrb[0].mxu0
        %2153 = vdwg.mxu0
        %v2154 = vmax.f32 %v2149, 0.0
        %v2155 = vpack.c.bf16 %v2154, %v2154
        %v2156 = vld [vmem:[%s9] sm:$0xf]
        %v2157 = vld [vmem:[%s9 + $0x4] sm:$0x1]
        %v2158 = vld [vmem:[%s10] sm:$0x1]
        %v2160 = vlaneseq
        %v2161 = vshrl.u32 %v2160, 7
        %v2162 = vsub.s32 0, %v2161
        %v2163 = vrot.slane %v2158, %v2162
        %v2167 = vunpack.c.l.b16 %v2156
        %v2168 = vunpack.c.l.b16 %v2157
        %v2169 = vpack.c.b16 %v2168, %v2167
        %vm2170 = vcmask 80896
        %v2172 = vsel %vm2170, %v2155, 0
        %vm2174 = vcmask 1044480
        %v2176 = vsel %vm2174, %v2169, 0
        %2178 = vmatprep.subr.bf16.mxu0 0
        %2179 = vmatpush1.bf16.msra.mxu0 %v2176
        %2180 = vmatprep.subr.bf16.mxu0 0
        %2181 = vmatpush1.bf16.msra.mxu0 0
        %2182 = vmatprep.subr.bf16.mxu0 0
        %2183 = vmatpush1.bf16.msra.mxu0 0
        %2184 = vmatprep.subr.bf16.mxu0 0
        %2185 = vmatpush1.bf16.msra.mxu0 0
        %2186 = vmatprep.subr.bf16.mxu0 0
        %2187 = vmatpush1.bf16.msra.mxu0 0
        %2188 = vmatprep.subr.bf16.mxu0 0
        %2189 = vmatpush1.bf16.msra.mxu0 0
        %2190 = vmatprep.subr.bf16.mxu0 0
        %2191 = vmatpush1.bf16.msra.mxu0 0
        %2192 = vmatprep.subr.bf16.mxu0 0
        %2193 = vmatpush1.bf16.msra.mxu0 0
        %2194 = vmatprep.subr.bf16.mxu0 0
        %2195 = vmatpush1.bf16.msra.mxu0 0
        %2196 = vmatprep.subr.bf16.mxu0 0
        %2197 = vmatpush1.bf16.msra.mxu0 0
        %2198 = vmatprep.subr.bf16.mxu0 0
        %2199 = vmatpush1.bf16.msra.mxu0 0
        %2200 = vmatprep.subr.bf16.mxu0 0
        %2201 = vmatpush1.bf16.msra.mxu0 0
        %2202 = vmatprep.subr.bf16.mxu0 0
        %2203 = vmatpush1.bf16.msra.mxu0 0
        %2204 = vmatprep.subr.bf16.mxu0 0
        %2205 = vmatpush1.bf16.msra.mxu0 0
        %2206 = vmatprep.subr.bf16.mxu0 0
        %2207 = vmatpush1.bf16.msra.mxu0 0
        %2208 = vmatprep.subr.bf16.mxu0 0
        %2209 = vmatpush1.bf16.msra.mxu0 0
        %2210 = vmatprep.mubr.bf16.mxu0 0
        %2211 = vmatmul.mubr.bf16.gmra.mrb[0].mxu0 %v2172
        %v2212 = vpop.f32.mrb[0].mxu0
        %v2213 = vadd.f32 %v2163, %v2212
        %v2214 = vpop.f32.mrb[0].mxu0
        %v2215 = vpop.f32.mrb[0].mxu0
        %v2216 = vpop.f32.mrb[0].mxu0
        %2217 = vdwg.mxu0
        %vm2218 = vcmask 15360
        %2219 = vst.msk [vmem:[%s414] sm:$0xff] %vm2218, %v2213
        %p2220 = scmp.lt.s32.totalorder %s24, 1
        %s2221 = scalar_select %p2220, %s24, 1
        %s2222 = smul.addr %s2221, 8
        %s2223 = scalar_lea.vmem %s11, %s2222
        // Predicated region
        $region73: #{tpu_custom_call.1} parent=63 // pred_check
          %p2224 = pneg %p278
        $region74: #{tpu_custom_call.1} parent=63 // pred_check_branch
          %2226 = sbr.rel (%p2224) target = $region76
        $region75: #{tpu_custom_call.1} parent=63 // pred_region
          _
        $region76: #{tpu_custom_call.1} parent=63 // pred_fallthru
          _
      $region64: #{tpu_custom_call.1} parent=5 // pred_fallthru
        _
      %p2227 = scmp.le.s32.totalorder 2, %s19
      // Predicated region
      $region77: #{tpu_custom_call.1} parent=5 // pred_check
        %p2228 = pneg %p2227
      $region78: #{tpu_custom_call.1} parent=5 // pred_check_branch
        %2230 = sbr.rel (%p2228) target = $region80
      $region79: #{tpu_custom_call.1} parent=5 // pred_region
        %s2231 = ssub.s32 %s19, 2
        // Predicated region
        $region81: #{tpu_custom_call.1} parent=79 // pred_check
          %p2232 = pneg %p284
        $region82: #{tpu_custom_call.1} parent=79 // pred_check_branch
          %2234 = sbr.rel (%p2232) target = $region84
        $region83: #{tpu_custom_call.1} parent=79 // pred_region
          %p2235 = scmp.lt.s32.totalorder %s25, 1
          %s2236 = scalar_select %p2235, %s25, 1
          %s2237 = smul.addr %s2236, 8
          %s2238 = scalar_lea.vmem %s11, %s2237
        $region84: #{tpu_custom_call.1} parent=79 // pred_fallthru
          _
      $region80: #{tpu_custom_call.1} parent=5 // pred_fallthru
        _
    $region6: #{tpu_custom_call.1} parent=1 // loop_footer
      %s23 = sadd.s32 1, %s19
    $region7: #{tpu_custom_call.1} parent=1 // loop_footer_branch
      %18 = sbr.rel target = $region3
    $region8: #{tpu_custom_call.1} parent=1 // loop_exit
      _
    %2239 = vsyncpa [#allocation3], 1
    %s2240 = scalar_lea.sflag [#allocation3], 1
    %2241 = vsyncpa %s2240, 1
    %2242 = vsyncpa [#allocation5], 1

</llo_original>
